<compile_context>
chip_gen: v6e
topology: v6e:2x2x1
jax: 0.10.0
libtpu: 0.0.40
codegen_flags: <defaults>
</compile_context>

<pallas_src>
import math
import functools

import jax
import jax.numpy as jnp
from jax.experimental import pallas as pl
from jax.experimental.pallas import tpu as pltpu


# ---------------------------------------------------------------------------
# fused ViTAttention kernel: one batch element per grid step
# ---------------------------------------------------------------------------
def vit_attention_kernel(
    x_ref,       # (1, S, D)  f32   input_tensor
    wqkv_ref,    # (D, 3D)    bf16  [Wq | Wk | Wv]
    bqkv_ref,    # (1, 3D)    f32   [bq | bk | bv]
    wso_ref,     # (D, D)     bf16  ViTSelfOutput dense weight
    bso_ref,     # (1, D)     f32   ViTSelfOutput dense bias
    o_ref,       # (1, S, D)  f32   attention_output
    ctx_ref,     # (S, D)     bf16  VMEM scratch: per-head context slab
    *,
    n_heads,
):
    S = x_ref.shape[1]
    D = x_ref.shape[2]
    dh = D // n_heads
    scale = 1.0 / math.sqrt(n_heads)   # reference divides by sqrt(n_heads)

    x = x_ref[0]                                             # (S, D) f32

    # ---- fused Q/K/V projection: one MXU pass with N = 3D ------------------
    qkv = (
        jnp.dot(x.astype(jnp.bfloat16), wqkv_ref[...],
                preferred_element_type=jnp.float32)
        + bqkv_ref[...]
    )                                                        # (S, 3D) f32
    q = qkv[:, 0 * D:1 * D].astype(jnp.bfloat16)
    k = qkv[:, 1 * D:2 * D].astype(jnp.bfloat16)
    v = qkv[:, 2 * D:3 * D].astype(jnp.bfloat16)

    # ---- per-head attention, contexts written into the scratch slab --------
    # (static, lane-aligned slices; no concatenate, no per-head values kept
    #  live past their iteration)
    for h in range(n_heads):
        sl = slice(h * dh, (h + 1) * dh)
        qh, kh, vh = q[:, sl], k[:, sl], v[:, sl]

        # scores = qh @ kh^T  (contract head dim, no explicit transpose)
        s = jax.lax.dot_general(
            qh, kh, (((1,), (1,)), ((), ())),
            preferred_element_type=jnp.float32,
        ) * scale                                            # (S, S) f32

        s = s - jnp.max(s, axis=-1, keepdims=True)
        p = jnp.exp(s)
        # softmax denominator on the EUP (approx reciprocal), frees VALU slots
        p = p * pl.reciprocal(jnp.sum(p, axis=-1, keepdims=True), approx=True)
        # attention-probs dropout (p=0.1) is identity at inference

        ctx_h = jnp.dot(p.astype(jnp.bfloat16), vh,
                        preferred_element_type=jnp.float32)  # (S, dh) f32
        ctx_ref[:, sl] = ctx_h.astype(jnp.bfloat16)

    # ---- ViTSelfOutput dense (input_tensor ignored: no residual) -----------
    out = (
        jnp.dot(ctx_ref[...], wso_ref[...],
                preferred_element_type=jnp.float32)
        + bso_ref[...]
    )                                                        # (S, D) f32
    o_ref[0] = out.astype(o_ref.dtype)


def vit_attention(x, wqkv, bqkv, wso, bso, *, n_heads):
    """x: (B, S, D) f32; wqkv: (D, 3D) bf16; wso: (D, D) bf16; biases f32."""
    B, S, D = x.shape
    assert D % n_heads == 0
    assert wqkv.shape == (D, 3 * D) and wso.shape == (D, D)

    return pl.pallas_call(
        functools.partial(vit_attention_kernel, n_heads=n_heads),
        out_shape=jax.ShapeDtypeStruct((B, S, D), jnp.float32),
        grid=(B,),
        in_specs=[
            pl.BlockSpec((1, S, D), lambda b: (b, 0, 0)),
            pl.BlockSpec((D, 3 * D), lambda b: (0, 0)),
            pl.BlockSpec((1, 3 * D), lambda b: (0, 0)),
            pl.BlockSpec((D, D), lambda b: (0, 0)),
            pl.BlockSpec((1, D), lambda b: (0, 0)),
        ],
        out_specs=pl.BlockSpec((1, S, D), lambda b: (b, 0, 0)),
        scratch_shapes=[pltpu.VMEM((S, D), jnp.bfloat16)],
        compiler_params=pltpu.CompilerParams(
            # batch elements are independent -> shard across TensorCores (v7x)
            dimension_semantics=("parallel",),
        ),
    )(x, wqkv, bqkv, wso, bso)


# ---------------------------------------------------------------------------
# pure-JAX reference with matching bf16 casts (for a correctness check)
# ---------------------------------------------------------------------------
def vit_attention_ref(x, wqkv, bqkv, wso, bso, *, n_heads):
    B, S, D = x.shape
    dh = D // n_heads
    scale = 1.0 / math.sqrt(n_heads)

    qkv = jnp.einsum("bsd,df->bsf", x.astype(jnp.bfloat16), wqkv,
                     preferred_element_type=jnp.float32) + bqkv
    q = qkv[..., 0 * D:1 * D].astype(jnp.bfloat16)
    k = qkv[..., 1 * D:2 * D].astype(jnp.bfloat16)
    v = qkv[..., 2 * D:3 * D].astype(jnp.bfloat16)

    def split(t):  # (B, S, D) -> (B, H, S, dh)
        return t.reshape(B, S, n_heads, dh).transpose(0, 2, 1, 3)

    qh, kh, vh = split(q), split(k), split(v)
    s = jnp.einsum("bhqd,bhkd->bhqk", qh, kh,
                   preferred_element_type=jnp.float32) * scale
    p = jax.nn.softmax(s, axis=-1)
    ctx = jnp.einsum("bhqk,bhkd->bhqd", p.astype(jnp.bfloat16), vh,
                     preferred_element_type=jnp.float32)
    ctx = ctx.transpose(0, 2, 1, 3).reshape(B, S, D)
    out = jnp.einsum("bsd,df->bsf", ctx.astype(jnp.bfloat16), wso,
                     preferred_element_type=jnp.float32) + bso
    return out


# ---------------------------------------------------------------------------
if __name__ == "__main__":
    # small, tile-aligned shapes consistent with ViTAttention(hidden_d, n_heads)
    B, S, D, n_heads = 2, 128, 256, 2          # head_dim = 128 (lane-aligned)

    key = jax.random.PRNGKey(0)
    kx, kq, kk, kv, kbq, kbk, kbv, kso, kbso = jax.random.split(key, 9)

    x = jax.random.normal(kx, (B, S, D), jnp.float32)

    def w(k, fi, fo):
        return jax.random.normal(k, (fi, fo), jnp.float32) * 0.02

    def b(k, fo):
        return jax.random.normal(k, (1, fo), jnp.float32) * 0.01

    wq, wk_, wv = w(kq, D, D), w(kk, D, D), w(kv, D, D)
    bq, bk_, bv = b(kbq, D), b(kbk, D), b(kbv, D)

    # fused [Wq | Wk | Wv] weight (bf16 for the MXU) and [bq | bk | bv] bias (f32)
    wqkv = jnp.concatenate([wq, wk_, wv], axis=1).astype(jnp.bfloat16)
    bqkv = jnp.concatenate([bq, bk_, bv], axis=1)
    wso = w(kso, D, D).astype(jnp.bfloat16)
    bso = b(kbso, D)

    out = vit_attention(x, wqkv, bqkv, wso, bso, n_heads=n_heads)
    out = jax.block_until_ready(out)

    assert out.shape == (B, S, D)
    assert bool(jnp.all(jnp.isfinite(out)))

    ref = vit_attention_ref(x, wqkv, bqkv, wso, bso, n_heads=n_heads)
    err = float(jnp.max(jnp.abs(out - ref)))
    assert err < 5e-3, f"max abs err vs reference: {err}"

    print("KERNEL_OK")
</pallas_src>

<mosaic_0001>
module attributes {stable_mosaic.version = 11 : i64} {
  func.func @vit_attention_kernel(%arg0: i32, %arg1: memref<1x128x256xf32, #tpu.memory_space<vmem>>, %arg2: memref<256x768xbf16, #tpu.memory_space<vmem>>, %arg3: memref<1x768xf32, #tpu.memory_space<vmem>>, %arg4: memref<256x256xbf16, #tpu.memory_space<vmem>>, %arg5: memref<1x256xf32, #tpu.memory_space<vmem>>, %arg6: memref<1x128x256xf32, #tpu.memory_space<vmem>>, %arg7: memref<128x256xbf16, #tpu.memory_space<vmem>>) attributes {dimension_semantics = [#tpu.dimension_semantics<parallel>], iteration_bounds = array<i64: 2>, scalar_prefetch = 0 : i64, scratch_operands = 1 : i64, tpu.core_type = #tpu.core_type<tc>, window_params = [{transform_indices = @transform_0, window_bounds = array<i64: 1, 128, 256>}, {pipeline_mode = #tpu.pipeline_mode<synchronous>, transform_indices = @transform_1, window_bounds = array<i64: 256, 768>}, {pipeline_mode = #tpu.pipeline_mode<synchronous>, transform_indices = @transform_2, window_bounds = array<i64: 1, 768>}, {pipeline_mode = #tpu.pipeline_mode<synchronous>, transform_indices = @transform_3, window_bounds = array<i64: 256, 256>}, {pipeline_mode = #tpu.pipeline_mode<synchronous>, transform_indices = @transform_4, window_bounds = array<i64: 1, 256>}, {transform_indices = @transform_5, window_bounds = array<i64: 1, 128, 256>}]} {
    %c0 = arith.constant 0 : index
    %c0_0 = arith.constant 0 : index
    %c0_1 = arith.constant 0 : index
    %0 = vector.load %arg1[%c0, %c0_0, %c0_1] : memref<1x128x256xf32, #tpu.memory_space<vmem>>, vector<1x128x256xf32>
    %1 = vector.shape_cast %0 : vector<1x128x256xf32> to vector<128x256xf32>
    %2 = arith.truncf %1 : vector<128x256xf32> to vector<128x256xbf16>
    %c0_2 = arith.constant 0 : index
    %c0_3 = arith.constant 0 : index
    %3 = vector.load %arg2[%c0_2, %c0_3] : memref<256x768xbf16, #tpu.memory_space<vmem>>, vector<256x768xbf16>
    %cst = arith.constant dense<0.000000e+00> : vector<128x768xf32>
    %4 = tpu.matmul %2, %3, %cst {dimension_numbers = #tpu.dot_dimension_numbers<[1], [0], [0], [1], [0, 0, 1, 1], [], []>} : vector<128x256xbf16>, vector<256x768xbf16>, vector<128x768xf32> -> vector<128x768xf32>
    %c0_4 = arith.constant 0 : index
    %c0_5 = arith.constant 0 : index
    %5 = vector.load %arg3[%c0_4, %c0_5] : memref<1x768xf32, #tpu.memory_space<vmem>>, vector<1x768xf32>
    %6 = vector.broadcast %5 : vector<1x768xf32> to vector<128x768xf32>
    %7 = arith.addf %4, %6 : vector<128x768xf32>
    %8 = vector.extract_strided_slice %7 {offsets = [0, 0], sizes = [128, 256], strides = [1, 1]} : vector<128x768xf32> to vector<128x256xf32>
    %9 = arith.truncf %8 : vector<128x256xf32> to vector<128x256xbf16>
    %10 = vector.extract_strided_slice %7 {offsets = [0, 256], sizes = [128, 256], strides = [1, 1]} : vector<128x768xf32> to vector<128x256xf32>
    %11 = arith.truncf %10 : vector<128x256xf32> to vector<128x256xbf16>
    %12 = vector.extract_strided_slice %7 {offsets = [0, 512], sizes = [128, 256], strides = [1, 1]} : vector<128x768xf32> to vector<128x256xf32>
    %13 = arith.truncf %12 : vector<128x256xf32> to vector<128x256xbf16>
    %14 = vector.extract_strided_slice %9 {offsets = [0, 0], sizes = [128, 128], strides = [1, 1]} : vector<128x256xbf16> to vector<128x128xbf16>
    %15 = vector.extract_strided_slice %11 {offsets = [0, 0], sizes = [128, 128], strides = [1, 1]} : vector<128x256xbf16> to vector<128x128xbf16>
    %16 = vector.extract_strided_slice %13 {offsets = [0, 0], sizes = [128, 128], strides = [1, 1]} : vector<128x256xbf16> to vector<128x128xbf16>
    %cst_6 = arith.constant dense<0.000000e+00> : vector<128x128xf32>
    %17 = tpu.matmul %14, %15, %cst_6 {dimension_numbers = #tpu.dot_dimension_numbers<[1], [1], [0], [0], [0, 0, 1, 0], [], []>} : vector<128x128xbf16>, vector<128x128xbf16>, vector<128x128xf32> -> vector<128x128xf32>
    %cst_7 = arith.constant 0.707106769 : f32
    %18 = vector.broadcast %cst_7 : f32 to vector<128x128xf32>
    %19 = arith.mulf %17, %18 : vector<128x128xf32>
    %cst_8 = arith.constant dense<0xFF800000> : vector<128xf32>
    %20 = vector.multi_reduction <maximumf>, %19, %cst_8 [1] : vector<128x128xf32> to vector<128xf32>
    %21 = vector.shape_cast %20 : vector<128xf32> to vector<128x1xf32>
    %22 = vector.broadcast %21 : vector<128x1xf32> to vector<128x128xf32>
    %23 = arith.subf %19, %22 : vector<128x128xf32>
    %24 = math.exp %23 : vector<128x128xf32>
    %cst_9 = arith.constant dense<0.000000e+00> : vector<128xf32>
    %25 = vector.multi_reduction <add>, %24, %cst_9 [1] : vector<128x128xf32> to vector<128xf32>
    %26 = vector.shape_cast %25 : vector<128xf32> to vector<128x1xf32>
    %27 = tpu.reciprocal %26 {approx = true} : vector<128x1xf32> -> vector<128x1xf32>
    %28 = vector.broadcast %27 : vector<128x1xf32> to vector<128x128xf32>
    %29 = arith.mulf %24, %28 : vector<128x128xf32>
    %30 = arith.truncf %29 : vector<128x128xf32> to vector<128x128xbf16>
    %cst_10 = arith.constant dense<0.000000e+00> : vector<128x128xf32>
    %31 = tpu.matmul %30, %16, %cst_10 {dimension_numbers = #tpu.dot_dimension_numbers<[1], [0], [0], [1], [0, 0, 1, 1], [], []>} : vector<128x128xbf16>, vector<128x128xbf16>, vector<128x128xf32> -> vector<128x128xf32>
    %32 = arith.truncf %31 : vector<128x128xf32> to vector<128x128xbf16>
    %c0_11 = arith.constant 0 : index
    %c0_12 = arith.constant 0 : index
    %33 = vector.load %arg7[%c0_11, %c0_12] : memref<128x256xbf16, #tpu.memory_space<vmem>>, vector<128x128xbf16>
    tpu.vector_store %arg7[%c0_11, %c0_12], %32 {strides = array<i32>} : memref<128x256xbf16, #tpu.memory_space<vmem>>, vector<128x128xbf16>,
    %34 = vector.extract_strided_slice %9 {offsets = [0, 128], sizes = [128, 128], strides = [1, 1]} : vector<128x256xbf16> to vector<128x128xbf16>
    %35 = vector.extract_strided_slice %11 {offsets = [0, 128], sizes = [128, 128], strides = [1, 1]} : vector<128x256xbf16> to vector<128x128xbf16>
    %36 = vector.extract_strided_slice %13 {offsets = [0, 128], sizes = [128, 128], strides = [1, 1]} : vector<128x256xbf16> to vector<128x128xbf16>
    %cst_13 = arith.constant dense<0.000000e+00> : vector<128x128xf32>
    %37 = tpu.matmul %34, %35, %cst_13 {dimension_numbers = #tpu.dot_dimension_numbers<[1], [1], [0], [0], [0, 0, 1, 0], [], []>} : vector<128x128xbf16>, vector<128x128xbf16>, vector<128x128xf32> -> vector<128x128xf32>
    %cst_14 = arith.constant 0.707106769 : f32
    %38 = vector.broadcast %cst_14 : f32 to vector<128x128xf32>
    %39 = arith.mulf %37, %38 : vector<128x128xf32>
    %cst_15 = arith.constant dense<0xFF800000> : vector<128xf32>
    %40 = vector.multi_reduction <maximumf>, %39, %cst_15 [1] : vector<128x128xf32> to vector<128xf32>
    %41 = vector.shape_cast %40 : vector<128xf32> to vector<128x1xf32>
    %42 = vector.broadcast %41 : vector<128x1xf32> to vector<128x128xf32>
    %43 = arith.subf %39, %42 : vector<128x128xf32>
    %44 = math.exp %43 : vector<128x128xf32>
    %cst_16 = arith.constant dense<0.000000e+00> : vector<128xf32>
    %45 = vector.multi_reduction <add>, %44, %cst_16 [1] : vector<128x128xf32> to vector<128xf32>
    %46 = vector.shape_cast %45 : vector<128xf32> to vector<128x1xf32>
    %47 = tpu.reciprocal %46 {approx = true} : vector<128x1xf32> -> vector<128x1xf32>
    %48 = vector.broadcast %47 : vector<128x1xf32> to vector<128x128xf32>
    %49 = arith.mulf %44, %48 : vector<128x128xf32>
    %50 = arith.truncf %49 : vector<128x128xf32> to vector<128x128xbf16>
    %cst_17 = arith.constant dense<0.000000e+00> : vector<128x128xf32>
    %51 = tpu.matmul %50, %36, %cst_17 {dimension_numbers = #tpu.dot_dimension_numbers<[1], [0], [0], [1], [0, 0, 1, 1], [], []>} : vector<128x128xbf16>, vector<128x128xbf16>, vector<128x128xf32> -> vector<128x128xf32>
    %52 = arith.truncf %51 : vector<128x128xf32> to vector<128x128xbf16>
    %c0_18 = arith.constant 0 : index
    %c128 = arith.constant 128 : index
    %53 = vector.load %arg7[%c0_18, %c128] : memref<128x256xbf16, #tpu.memory_space<vmem>>, vector<128x128xbf16>
    tpu.vector_store %arg7[%c0_18, %c128], %52 {strides = array<i32>} : memref<128x256xbf16, #tpu.memory_space<vmem>>, vector<128x128xbf16>,
    %c0_19 = arith.constant 0 : index
    %c0_20 = arith.constant 0 : index
    %54 = vector.load %arg7[%c0_19, %c0_20] : memref<128x256xbf16, #tpu.memory_space<vmem>>, vector<128x256xbf16>
    %c0_21 = arith.constant 0 : index
    %c0_22 = arith.constant 0 : index
    %55 = vector.load %arg4[%c0_21, %c0_22] : memref<256x256xbf16, #tpu.memory_space<vmem>>, vector<256x256xbf16>
    %cst_23 = arith.constant dense<0.000000e+00> : vector<128x256xf32>
    %56 = tpu.matmul %54, %55, %cst_23 {dimension_numbers = #tpu.dot_dimension_numbers<[1], [0], [0], [1], [0, 0, 1, 1], [], []>} : vector<128x256xbf16>, vector<256x256xbf16>, vector<128x256xf32> -> vector<128x256xf32>
    %c0_24 = arith.constant 0 : index
    %c0_25 = arith.constant 0 : index
    %57 = vector.load %arg5[%c0_24, %c0_25] : memref<1x256xf32, #tpu.memory_space<vmem>>, vector<1x256xf32>
    %58 = vector.broadcast %57 : vector<1x256xf32> to vector<128x256xf32>
    %59 = arith.addf %56, %58 : vector<128x256xf32>
    %c0_26 = arith.constant 0 : index
    %c0_27 = arith.constant 0 : index
    %c0_28 = arith.constant 0 : index
    %60 = vector.load %arg6[%c0_26, %c0_27, %c0_28] : memref<1x128x256xf32, #tpu.memory_space<vmem>>, vector<1x128x256xf32>
    %61 = vector.shape_cast %60 : vector<1x128x256xf32> to vector<128x256xf32>
    %62 = vector.shape_cast %59 : vector<128x256xf32> to vector<1x128x256xf32>
    tpu.vector_store %arg6[%c0_26, %c0_27, %c0_28], %62 {strides = array<i32>} : memref<1x128x256xf32, #tpu.memory_space<vmem>>, vector<1x128x256xf32>,
    return
  }
  func.func @transform_0(%arg0: i32) -> (i32, i32, i32) {
    %c0_i32 = arith.constant 0 : i32
    %c0_i32_0 = arith.constant 0 : i32
    %c0_i32_1 = arith.constant 0 : i32
    return %arg0, %c0_i32, %c0_i32_0 : i32, i32, i32
  }
  func.func @transform_1(%arg0: i32) -> (i32, i32) {
    %c0_i32 = arith.constant 0 : i32
    %c0_i32_0 = arith.constant 0 : i32
    %c0_i32_1 = arith.constant 0 : i32
    return %c0_i32, %c0_i32_0 : i32, i32
  }
  func.func @transform_2(%arg0: i32) -> (i32, i32) {
    %c0_i32 = arith.constant 0 : i32
    %c0_i32_0 = arith.constant 0 : i32
    %c0_i32_1 = arith.constant 0 : i32
    return %c0_i32, %c0_i32_0 : i32, i32
  }
  func.func @transform_3(%arg0: i32) -> (i32, i32) {
    %c0_i32 = arith.constant 0 : i32
    %c0_i32_0 = arith.constant 0 : i32
    %c0_i32_1 = arith.constant 0 : i32
    return %c0_i32, %c0_i32_0 : i32, i32
  }
  func.func @transform_4(%arg0: i32) -> (i32, i32) {
    %c0_i32 = arith.constant 0 : i32
    %c0_i32_0 = arith.constant 0 : i32
    %c0_i32_1 = arith.constant 0 : i32
    return %c0_i32, %c0_i32_0 : i32, i32
  }
  func.func @transform_5(%arg0: i32) -> (i32, i32, i32) {
    %c0_i32 = arith.constant 0 : i32
    %c0_i32_0 = arith.constant 0 : i32
    %c0_i32_1 = arith.constant 0 : i32
    return %arg0, %c0_i32, %c0_i32_0 : i32, i32, i32
  }
}

</mosaic_0001>

<llo_original>
// kernel: tpu_custom_call.1
$region0: #{tpu_custom_call.1}
  #allocation0 [shape = 'u32[]', space=smem, size = 0x4, offset = 0x4, fixed_abs, tag = 'smem constant byte address 0x4 - core index']
  #allocation1 [shape = 'u32[144,128]{1,0:T(1,128)}', space=vmem, size = 0x12000, scoped, tag = 'internal scratch']
  #allocation2 [shape = 'bf16[128,256]{1,0:T(8,128)(2,1)}', space=vmem, size = 0x10000, scoped, tag = 'scratch operand']
  %s0 = inlined_call_operand.hbm [shape: f32[2,128,256], index: 0, kind: input, shape index: {}]
  %s1 = inlined_call_operand.hbm [shape: bf16[256,768], index: 1, kind: input, shape index: {}]
  %s2 = inlined_call_operand.hbm [shape: f32[1,768], index: 2, kind: input, shape index: {}]
  %s3 = inlined_call_operand.hbm [shape: bf16[256,256], index: 3, kind: input, shape index: {}]
  %s4 = inlined_call_operand.vmem [shape: f32[1,256], index: 4, kind: input, shape index: {}]
  %s5 = inlined_call_operand.hbm [shape: f32[2,128,256], index: 5, kind: output, shape index: {}]
  %s6 = sld [smem:[#allocation0]]
  $region69: #{tpu_custom_call.1} parent=0
    _
  %s8 = ssub.s32 1, %s6
  %s9 = scalar_select 0, %s8, %s6
  $region1: #{tpu_custom_call.1} parent=0
    #allocation3 [shape = 'u8[262144]{0}', space=vmem, size = 0x40000, scoped, tag = 'input window, operand 0']
    #allocation4 [shape = 's32[2]{0}', space=sflag, size = 0x8, scoped, tag = 'scoped memory for tpu_custom_call.1']
    #allocation5 [shape = 's32[2]{0}', space=sflag, size = 0x8, scoped, tag = 'scoped memory for tpu_custom_call.1']
    #allocation6 [shape = 'u8[393216]{0}', space=vmem, size = 0x60000, scoped, tag = 'input window, operand 1, single buffered']
    #allocation7 [shape = 's32[1]{0}', space=sflag, size = 0x4, scoped, tag = 'scoped memory for tpu_custom_call.1']
    #allocation8 [shape = 'u8[3072]{0}', space=vmem, size = 0xc00, scoped, tag = 'input window, operand 2, single buffered']
    #allocation9 [shape = 'u8[131072]{0}', space=vmem, size = 0x20000, scoped, tag = 'input window, operand 3, single buffered']
    #allocation10 [shape = 's32[1]{0}', space=sflag, size = 0x4, scoped, tag = 'scoped memory for tpu_custom_call.1']
    #allocation11 [shape = 'u8[262144]{0}', space=vmem, size = 0x40000, scoped, tag = 'output window, operand 0']
    %10 = vsyncpa [#allocation4], 0
    %s11 = scalar_lea.sflag [#allocation4], 1
    %12 = vsyncpa %s11, 0
    %13 = vsyncpa [#allocation7], 0
    %14 = vsyncpa [#allocation10], 0
    %15 = vsyncpa [#allocation5], 0
    %s16 = scalar_lea.sflag [#allocation5], 1
    %17 = vsyncpa %s16, 0
    loop: start=0, step=1, limit=4
    $region2: #{tpu_custom_call.1} parent=1 // loop_pre_header
      _
    $region3: #{tpu_custom_call.1} parent=1 // loop_header
      %s19 = sphi 0, %s23
      %p20 = scmp.ge.s32.totalorder %s19, 4
      %s29 = sphi 0, %s31
      %s32 = sphi 0, %s29
      %s33 = sphi 0, %s32
      %s49 = sphi 0, %s33
      %s53 = sphi 0, %s53
      %s55 = sphi 0, %s53
      %s56 = sphi 0, %s55
      %s70 = sphi 0, %s56
      %s74 = sphi 0, %s74
      %s76 = sphi 0, %s74
      %s77 = sphi 0, %s76
      %s91 = sphi 0, %s77
      %s95 = sphi 0, %s95
      %s97 = sphi 0, %s95
      %s98 = sphi 0, %s97
      %s112 = sphi 0, %s98
      %s116 = sphi 0, %s116
      %s118 = sphi 0, %s116
      %s119 = sphi 0, %s118
      %s133 = sphi 0, %s119
      %s139 = sphi 0, %s141
      %s142 = sphi 0, %s139
      %s143 = sphi 0, %s142
      %s159 = sphi 0, %s143
    $region4: #{tpu_custom_call.1} parent=1 // loop_header_branch
      %22 = sbr.rel (%p20) target = $region8
    $region5: #{tpu_custom_call.1} parent=1 // loop_body
      %s24 = ssub.s32 %s19, 1
      %s25 = ssub.s32 %s19, 2
      %s26 = sadd.s32 %s19, 1
      %s27 = ssub.s32 %s19, %s26
      %p28 = scmp.eq.s32.totalorder %s27, 0
      %s30 = sadd.s32 %s29, 1
      %s31 = scalar_select %p28, %s29, %s30
      %p34 = pneg %p28
      %p35 = scmp.eq.s32.totalorder %s19, 1
      %p36 = por %p34, %p35
      %p37 = scmp.ne.s32.totalorder %s29, %s32
      %p38 = scmp.eq.s32.totalorder %s19, 0
      %p39 = por %p37, %p38
      %p40 = scmp.ne.s32.totalorder %s29, %s32
      %p41 = scmp.eq.s32.totalorder %s24, 1
      %p42 = por %p40, %p41
      %p43 = scmp.ne.s32.totalorder %s32, %s33
      %p44 = scmp.eq.s32.totalorder %s24, 0
      %p45 = por %p43, %p44
      %p46 = scmp.ne.s32.totalorder %s32, %s33
      %p47 = scmp.eq.s32.totalorder %s25, 1
      %p48 = por %p46, %p47
      %p50 = scmp.ne.s32.totalorder %s33, %s49
      %p51 = scmp.eq.s32.totalorder %s25, 0
      %p52 = por %p50, %p51
      %s54 = sadd.s32 %s53, 1
      %p57 = scmp.eq.s32.totalorder %s19, 1
      %p58 = scmp.ne.s32.totalorder %s53, %s55
      %p59 = scmp.eq.s32.totalorder %s19, 0
      %p60 = por %p58, %p59
      %p61 = scmp.ne.s32.totalorder %s53, %s55
      %p62 = scmp.eq.s32.totalorder %s24, 1
      %p63 = por %p61, %p62
      %p64 = scmp.ne.s32.totalorder %s55, %s56
      %p65 = scmp.eq.s32.totalorder %s24, 0
      %p66 = por %p64, %p65
      %p67 = scmp.ne.s32.totalorder %s55, %s56
      %p68 = scmp.eq.s32.totalorder %s25, 1
      %p69 = por %p67, %p68
      %p71 = scmp.ne.s32.totalorder %s56, %s70
      %p72 = scmp.eq.s32.totalorder %s25, 0
      %p73 = por %p71, %p72
      %s75 = sadd.s32 %s74, 1
      %p78 = scmp.eq.s32.totalorder %s19, 1
      %p79 = scmp.ne.s32.totalorder %s74, %s76
      %p80 = scmp.eq.s32.totalorder %s19, 0
      %p81 = por %p79, %p80
      %p82 = scmp.ne.s32.totalorder %s74, %s76
      %p83 = scmp.eq.s32.totalorder %s24, 1
      %p84 = por %p82, %p83
      %p85 = scmp.ne.s32.totalorder %s76, %s77
      %p86 = scmp.eq.s32.totalorder %s24, 0
      %p87 = por %p85, %p86
      %p88 = scmp.ne.s32.totalorder %s76, %s77
      %p89 = scmp.eq.s32.totalorder %s25, 1
      %p90 = por %p88, %p89
      %p92 = scmp.ne.s32.totalorder %s77, %s91
      %p93 = scmp.eq.s32.totalorder %s25, 0
      %p94 = por %p92, %p93
      %s96 = sadd.s32 %s95, 1
      %p99 = scmp.eq.s32.totalorder %s19, 1
      %p100 = scmp.ne.s32.totalorder %s95, %s97
      %p101 = scmp.eq.s32.totalorder %s19, 0
      %p102 = por %p100, %p101
      %p103 = scmp.ne.s32.totalorder %s95, %s97
      %p104 = scmp.eq.s32.totalorder %s24, 1
      %p105 = por %p103, %p104
      %p106 = scmp.ne.s32.totalorder %s97, %s98
      %p107 = scmp.eq.s32.totalorder %s24, 0
      %p108 = por %p106, %p107
      %p109 = scmp.ne.s32.totalorder %s97, %s98
      %p110 = scmp.eq.s32.totalorder %s25, 1
      %p111 = por %p109, %p110
      %p113 = scmp.ne.s32.totalorder %s98, %s112
      %p114 = scmp.eq.s32.totalorder %s25, 0
      %p115 = por %p113, %p114
      %s117 = sadd.s32 %s116, 1
      %p120 = scmp.eq.s32.totalorder %s19, 1
      %p121 = scmp.ne.s32.totalorder %s116, %s118
      %p122 = scmp.eq.s32.totalorder %s19, 0
      %p123 = por %p121, %p122
      %p124 = scmp.ne.s32.totalorder %s116, %s118
      %p125 = scmp.eq.s32.totalorder %s24, 1
      %p126 = por %p124, %p125
      %p127 = scmp.ne.s32.totalorder %s118, %s119
      %p128 = scmp.eq.s32.totalorder %s24, 0
      %p129 = por %p127, %p128
      %p130 = scmp.ne.s32.totalorder %s118, %s119
      %p131 = scmp.eq.s32.totalorder %s25, 1
      %p132 = por %p130, %p131
      %p134 = scmp.ne.s32.totalorder %s119, %s133
      %p135 = scmp.eq.s32.totalorder %s25, 0
      %p136 = por %p134, %p135
      %s137 = ssub.s32 %s19, %s26
      %p138 = scmp.eq.s32.totalorder %s137, 0
      %s140 = sadd.s32 %s139, 1
      %s141 = scalar_select %p138, %s139, %s140
      %p144 = pneg %p138
      %p145 = scmp.eq.s32.totalorder %s19, 1
      %p146 = por %p144, %p145
      %p147 = scmp.ne.s32.totalorder %s139, %s142
      %p148 = scmp.eq.s32.totalorder %s19, 0
      %p149 = por %p147, %p148
      %p150 = scmp.ne.s32.totalorder %s139, %s142
      %p151 = scmp.eq.s32.totalorder %s24, 1
      %p152 = por %p150, %p151
      %p153 = scmp.ne.s32.totalorder %s142, %s143
      %p154 = scmp.eq.s32.totalorder %s24, 0
      %p155 = por %p153, %p154
      %p156 = scmp.ne.s32.totalorder %s142, %s143
      %p157 = scmp.eq.s32.totalorder %s25, 1
      %p158 = por %p156, %p157
      %p160 = scmp.ne.s32.totalorder %s143, %s159
      %p161 = scmp.eq.s32.totalorder %s25, 0
      %p162 = por %p160, %p161
      %p163 = scmp.le.s32.totalorder 1, %s19
      %p164 = scmp.lt.s32.totalorder %s19, 3
      %p165 = pnand %p163, %p164
      %p166 = pneg %p165
      // Predicated region
      $region9: #{tpu_custom_call.1} parent=5 // pred_check
        _
      $region10: #{tpu_custom_call.1} parent=5 // pred_check_branch
        %168 = sbr.rel (%p165) target = $region12
      $region11: #{tpu_custom_call.1} parent=5 // pred_region
        %s169 = ssub.s32 %s19, 1
        // Predicated region
        $region13: #{tpu_custom_call.1} parent=11 // pred_check
          %p170 = pneg %p66
        $region14: #{tpu_custom_call.1} parent=11 // pred_check_branch
          %172 = sbr.rel (%p170) target = $region16
        $region15: #{tpu_custom_call.1} parent=11 // pred_region
          %s174 = ssub.s32 12288, 12288
          %175 = vsyncadd [#allocation7], %s174
          %s176 = sshll.u32 [#allocation6], 4
          %s177 = int_to_ptr.vmem [resolvable:$true] %s176
          %182 = dma.hbm_to_vmem [thread:$0]  %s1, 12288, %s177, [#allocation7], 384, 384, 24
        $region16: #{tpu_custom_call.1} parent=11 // pred_fallthru
          _
        // Predicated region
        $region17: #{tpu_custom_call.1} parent=11 // pred_check
          %p183 = pneg %p87
        $region18: #{tpu_custom_call.1} parent=11 // pred_check_branch
          %185 = sbr.rel (%p183) target = $region20
        $region19: #{tpu_custom_call.1} parent=11 // pred_region
          %s187 = ssub.s32 96, 96
          %188 = vsyncadd [#allocation7], %s187
          %s190 = sshll.u32 [#allocation8], 4
          %s191 = int_to_ptr.vmem [resolvable:$true] %s190
          %193 = dma.hbm_to_vmem [thread:$0]  %s2, 96, %s191, [#allocation7]
        $region20: #{tpu_custom_call.1} parent=11 // pred_fallthru
          _
        // Predicated region
        $region21: #{tpu_custom_call.1} parent=11 // pred_check
          %p194 = pneg %p108
        $region22: #{tpu_custom_call.1} parent=11 // pred_check_branch
          %196 = sbr.rel (%p194) target = $region24
        $region23: #{tpu_custom_call.1} parent=11 // pred_region
          %s198 = ssub.s32 4096, 4096
          %199 = vsyncadd [#allocation10], %s198
          %s200 = sshll.u32 [#allocation9], 4
          %s201 = int_to_ptr.vmem [resolvable:$true] %s200
          %206 = dma.hbm_to_vmem [thread:$0]  %s3, 4096, %s201, [#allocation10], 128, 128, 8
        $region24: #{tpu_custom_call.1} parent=11 // pred_fallthru
          _
        // Predicated region
        $region25: #{tpu_custom_call.1} parent=11 // pred_check
          %p207 = pneg %p129
        $region26: #{tpu_custom_call.1} parent=11 // pred_check_branch
          %209 = sbr.rel (%p207) target = $region28
        $region27: #{tpu_custom_call.1} parent=11 // pred_region
          _
        $region28: #{tpu_custom_call.1} parent=11 // pred_fallthru
          _
      $region12: #{tpu_custom_call.1} parent=5 // pred_fallthru
        _
      %p210 = scmp.lt.s32.totalorder %s19, 2
      // Predicated region
      $region29: #{tpu_custom_call.1} parent=5 // pred_check
        %p211 = pneg %p210
      $region30: #{tpu_custom_call.1} parent=5 // pred_check_branch
        %213 = sbr.rel (%p211) target = $region32
      $region31: #{tpu_custom_call.1} parent=5 // pred_region
        // Predicated region
        $region33: #{tpu_custom_call.1} parent=31 // pred_check
          %p214 = pneg %p39
        $region34: #{tpu_custom_call.1} parent=31 // pred_check_branch
          %216 = sbr.rel (%p214) target = $region36
        $region35: #{tpu_custom_call.1} parent=31 // pred_region
          %s217 = sand.u32 %s29, 1
          %s218 = scalar_lea.sflag [#allocation4], %s217
          %s219 = sand.u32 %s29, 1
          %s220 = smul.addr %s219, 256
          %s221 = scalar_lea.vmem [#allocation3], %s220
          %s223 = ssub.s32 4096, 4096
          %224 = vsyncadd %s218, %s223
          %s225 = smul.addr %s19, 32
          %s226 = smul.addr %s225, 128
          %s227 = scalar_lea.hbm %s0, %s226
          %s228 = sshll.u32 %s221, 4
          %s229 = int_to_ptr.vmem [resolvable:$true] %s228
          %234 = dma.hbm_to_vmem [thread:$0]  %s227, 4096, %s229, %s218, 256, 256, 16
        $region36: #{tpu_custom_call.1} parent=31 // pred_fallthru
          _
      $region32: #{tpu_custom_call.1} parent=5 // pred_fallthru
        _
      %p235 = scmp.le.s32.totalorder 1, %s19
      %p236 = scmp.lt.s32.totalorder %s19, 3
      %p237 = pnand %p235, %p236
      %p238 = pneg %p237
      // Predicated region
      $region37: #{tpu_custom_call.1} parent=5 // pred_check
        _
      $region38: #{tpu_custom_call.1} parent=5 // pred_check_branch
        %240 = sbr.rel (%p237) target = $region40
      $region39: #{tpu_custom_call.1} parent=5 // pred_region
        %s241 = ssub.s32 %s19, 1
        %s242 = sand.u32 %s32, 1
        %s243 = scalar_lea.sflag [#allocation4], %s242
        %s244 = sand.u32 %s32, 1
        %s245 = smul.addr %s244, 256
        %s246 = scalar_lea.vmem [#allocation3], %s245
        // Predicated region
        $region41: #{tpu_custom_call.1} parent=39 // pred_check
          %p247 = pneg %p45
        $region42: #{tpu_custom_call.1} parent=39 // pred_check_branch
          %249 = sbr.rel (%p247) target = $region44
        $region43: #{tpu_custom_call.1} parent=39 // pred_region
          %250 = dma.done %s243, 4096
        $region44: #{tpu_custom_call.1} parent=39 // pred_fallthru
          _
        // Predicated region
        $region45: #{tpu_custom_call.1} parent=39 // pred_check
          %p251 = pneg %p66
        $region46: #{tpu_custom_call.1} parent=39 // pred_check_branch
          %253 = sbr.rel (%p251) target = $region48
        $region47: #{tpu_custom_call.1} parent=39 // pred_region
          %254 = dma.done [#allocation7], 12288
        $region48: #{tpu_custom_call.1} parent=39 // pred_fallthru
          _
        // Predicated region
        $region49: #{tpu_custom_call.1} parent=39 // pred_check
          %p255 = pneg %p87
        $region50: #{tpu_custom_call.1} parent=39 // pred_check_branch
          %257 = sbr.rel (%p255) target = $region52
        $region51: #{tpu_custom_call.1} parent=39 // pred_region
          %258 = dma.done [#allocation7], 96
        $region52: #{tpu_custom_call.1} parent=39 // pred_fallthru
          _
        // Predicated region
        $region53: #{tpu_custom_call.1} parent=39 // pred_check
          %p259 = pneg %p108
        $region54: #{tpu_custom_call.1} parent=39 // pred_check_branch
          %261 = sbr.rel (%p259) target = $region56
        $region55: #{tpu_custom_call.1} parent=39 // pred_region
          %262 = dma.done [#allocation10], 4096
        $region56: #{tpu_custom_call.1} parent=39 // pred_fallthru
          _
        %s263 = sand.u32 %s32, 1
        %s264 = scalar_lea.sflag [#allocation4], %s263
        %s265 = sand.u32 %s32, 1
        %s266 = smul.addr %s265, 256
        %s267 = scalar_lea.vmem [#allocation3], %s266
        %p268 = pneg %p45
        %p269 = pneg %p42
        %p270 = pneg %p66
        %p271 = pneg %p63
        %p272 = pneg %p87
        %p273 = pneg %p84
        %p274 = pneg %p108
        %p275 = pneg %p105
        %p276 = pneg %p129
        %p277 = pneg %p126
        %p278 = pneg %p155
        %p279 = pneg %p152
        %s280 = sand.u32 %s142, 1
        %s281 = scalar_lea.sflag [#allocation5], %s280
        %s282 = sand.u32 %s142, 1
        %s283 = smul.addr %s282, 256
        %s284 = scalar_lea.vmem [#allocation11], %s283
        %v286 = vld [vmem:[%s246] sm:$0xff]
        %v287 = vld [vmem:[%s246 + $0x8] sm:$0xff]
        %v288 = vld [vmem:[%s246 + $0x10] sm:$0xff]
        %v289 = vld [vmem:[%s246 + $0x18] sm:$0xff]
        %v290 = vld [vmem:[%s246 + $0x20] sm:$0xff]
        %v291 = vld [vmem:[%s246 + $0x28] sm:$0xff]
        %v292 = vld [vmem:[%s246 + $0x30] sm:$0xff]
        %v293 = vld [vmem:[%s246 + $0x38] sm:$0xff]
        %v294 = vld [vmem:[%s246 + $0x40] sm:$0xff]
        %v295 = vld [vmem:[%s246 + $0x48] sm:$0xff]
        %v296 = vld [vmem:[%s246 + $0x50] sm:$0xff]
        %v297 = vld [vmem:[%s246 + $0x58] sm:$0xff]
        %v298 = vld [vmem:[%s246 + $0x60] sm:$0xff]
        %v299 = vld [vmem:[%s246 + $0x68] sm:$0xff]
        %v300 = vld [vmem:[%s246 + $0x70] sm:$0xff]
        %v301 = vld [vmem:[%s246 + $0x78] sm:$0xff]
        %v302 = vld [vmem:[%s246 + $0x80] sm:$0xff]
        %v303 = vld [vmem:[%s246 + $0x88] sm:$0xff]
        %v304 = vld [vmem:[%s246 + $0x90] sm:$0xff]
        %v305 = vld [vmem:[%s246 + $0x98] sm:$0xff]
        %v306 = vld [vmem:[%s246 + $0xa0] sm:$0xff]
        %v307 = vld [vmem:[%s246 + $0xa8] sm:$0xff]
        %v308 = vld [vmem:[%s246 + $0xb0] sm:$0xff]
        %v309 = vld [vmem:[%s246 + $0xb8] sm:$0xff]
        %v310 = vld [vmem:[%s246 + $0xc0] sm:$0xff]
        %v311 = vld [vmem:[%s246 + $0xc8] sm:$0xff]
        %v312 = vld [vmem:[%s246 + $0xd0] sm:$0xff]
        %v313 = vld [vmem:[%s246 + $0xd8] sm:$0xff]
        %v314 = vld [vmem:[%s246 + $0xe0] sm:$0xff]
        %v315 = vld [vmem:[%s246 + $0xe8] sm:$0xff]
        %v316 = vld [vmem:[%s246 + $0xf0] sm:$0xff]
        %v317 = vld [vmem:[%s246 + $0xf8] sm:$0xff]
        %v318 = vpack.c.bf16 %v288, %v286
        %v319 = vpack.c.bf16 %v289, %v287
        %v320 = vpack.c.bf16 %v292, %v290
        %v321 = vpack.c.bf16 %v293, %v291
        %v322 = vpack.c.bf16 %v296, %v294
        %v323 = vpack.c.bf16 %v297, %v295
        %v324 = vpack.c.bf16 %v300, %v298
        %v325 = vpack.c.bf16 %v301, %v299
        %v326 = vpack.c.bf16 %v304, %v302
        %v327 = vpack.c.bf16 %v305, %v303
        %v328 = vpack.c.bf16 %v308, %v306
        %v329 = vpack.c.bf16 %v309, %v307
        %v330 = vpack.c.bf16 %v312, %v310
        %v331 = vpack.c.bf16 %v313, %v311
        %v332 = vpack.c.bf16 %v316, %v314
        %v333 = vpack.c.bf16 %v317, %v315
        %v334 = vld [vmem:[#allocation6] sm:$0xff]
        %v335 = vld [vmem:[#allocation6 + $0x8] sm:$0xff]
        %v336 = vld [vmem:[#allocation6 + $0x10] sm:$0xff]
        %v337 = vld [vmem:[#allocation6 + $0x18] sm:$0xff]
        %v338 = vld [vmem:[#allocation6 + $0x20] sm:$0xff]
        %v339 = vld [vmem:[#allocation6 + $0x28] sm:$0xff]
        %v340 = vld [vmem:[#allocation6 + $0x30] sm:$0xff]
        %v341 = vld [vmem:[#allocation6 + $0x38] sm:$0xff]
        %v342 = vld [vmem:[#allocation6 + $0x40] sm:$0xff]
        %v343 = vld [vmem:[#allocation6 + $0x48] sm:$0xff]
        %v344 = vld [vmem:[#allocation6 + $0x50] sm:$0xff]
        %v345 = vld [vmem:[#allocation6 + $0x58] sm:$0xff]
        %v346 = vld [vmem:[#allocation6 + $0x60] sm:$0xff]
        %v347 = vld [vmem:[#allocation6 + $0x68] sm:$0xff]
        %v348 = vld [vmem:[#allocation6 + $0x70] sm:$0xff]
        %v349 = vld [vmem:[#allocation6 + $0x78] sm:$0xff]
        %v350 = vld [vmem:[#allocation6 + $0x80] sm:$0xff]
        %v351 = vld [vmem:[#allocation6 + $0x88] sm:$0xff]
        %v352 = vld [vmem:[#allocation6 + $0x90] sm:$0xff]
        %v353 = vld [vmem:[#allocation6 + $0x98] sm:$0xff]
        %v354 = vld [vmem:[#allocation6 + $0xa0] sm:$0xff]
        %v355 = vld [vmem:[#allocation6 + $0xa8] sm:$0xff]
        %v356 = vld [vmem:[#allocation6 + $0xb0] sm:$0xff]
        %v357 = vld [vmem:[#allocation6 + $0xb8] sm:$0xff]
        %v358 = vld [vmem:[#allocation6 + $0xc0] sm:$0xff]
        %v359 = vld [vmem:[#allocation6 + $0xc8] sm:$0xff]
        %v360 = vld [vmem:[#allocation6 + $0xd0] sm:$0xff]
        %v361 = vld [vmem:[#allocation6 + $0xd8] sm:$0xff]
        %v362 = vld [vmem:[#allocation6 + $0xe0] sm:$0xff]
        %v363 = vld [vmem:[#allocation6 + $0xe8] sm:$0xff]
        %v364 = vld [vmem:[#allocation6 + $0xf0] sm:$0xff]
        %v365 = vld [vmem:[#allocation6 + $0xf8] sm:$0xff]
        %v366 = vld [vmem:[#allocation6 + $0x100] sm:$0xff]
        %v367 = vld [vmem:[#allocation6 + $0x108] sm:$0xff]
        %v368 = vld [vmem:[#allocation6 + $0x110] sm:$0xff]
        %v369 = vld [vmem:[#allocation6 + $0x118] sm:$0xff]
        %v370 = vld [vmem:[#allocation6 + $0x120] sm:$0xff]
        %v371 = vld [vmem:[#allocation6 + $0x128] sm:$0xff]
        %v372 = vld [vmem:[#allocation6 + $0x130] sm:$0xff]
        %v373 = vld [vmem:[#allocation6 + $0x138] sm:$0xff]
        %v374 = vld [vmem:[#allocation6 + $0x140] sm:$0xff]
        %v375 = vld [vmem:[#allocation6 + $0x148] sm:$0xff]
        %v376 = vld [vmem:[#allocation6 + $0x150] sm:$0xff]
        %v377 = vld [vmem:[#allocation6 + $0x158] sm:$0xff]
        %v378 = vld [vmem:[#allocation6 + $0x160] sm:$0xff]
        %v379 = vld [vmem:[#allocation6 + $0x168] sm:$0xff]
        %v380 = vld [vmem:[#allocation6 + $0x170] sm:$0xff]
        %v381 = vld [vmem:[#allocation6 + $0x178] sm:$0xff]
        %v382 = vld [vmem:[#allocation6 + $0x180] sm:$0xff]
        %v383 = vld [vmem:[#allocation6 + $0x188] sm:$0xff]
        %v384 = vld [vmem:[#allocation6 + $0x190] sm:$0xff]
        %v385 = vld [vmem:[#allocation6 + $0x198] sm:$0xff]
        %v386 = vld [vmem:[#allocation6 + $0x1a0] sm:$0xff]
        %v387 = vld [vmem:[#allocation6 + $0x1a8] sm:$0xff]
        %v388 = vld [vmem:[#allocation6 + $0x1b0] sm:$0xff]
        %v389 = vld [vmem:[#allocation6 + $0x1b8] sm:$0xff]
        %v390 = vld [vmem:[#allocation6 + $0x1c0] sm:$0xff]
        %v391 = vld [vmem:[#allocation6 + $0x1c8] sm:$0xff]
        %v392 = vld [vmem:[#allocation6 + $0x1d0] sm:$0xff]
        %v393 = vld [vmem:[#allocation6 + $0x1d8] sm:$0xff]
        %v394 = vld [vmem:[#allocation6 + $0x1e0] sm:$0xff]
        %v395 = vld [vmem:[#allocation6 + $0x1e8] sm:$0xff]
        %v396 = vld [vmem:[#allocation6 + $0x1f0] sm:$0xff]
        %v397 = vld [vmem:[#allocation6 + $0x1f8] sm:$0xff]
        %v398 = vld [vmem:[#allocation6 + $0x200] sm:$0xff]
        %v399 = vld [vmem:[#allocation6 + $0x208] sm:$0xff]
        %v400 = vld [vmem:[#allocation6 + $0x210] sm:$0xff]
        %v401 = vld [vmem:[#allocation6 + $0x218] sm:$0xff]
        %v402 = vld [vmem:[#allocation6 + $0x220] sm:$0xff]
        %v403 = vld [vmem:[#allocation6 + $0x228] sm:$0xff]
        %v404 = vld [vmem:[#allocation6 + $0x230] sm:$0xff]
        %v405 = vld [vmem:[#allocation6 + $0x238] sm:$0xff]
        %v406 = vld [vmem:[#allocation6 + $0x240] sm:$0xff]
        %v407 = vld [vmem:[#allocation6 + $0x248] sm:$0xff]
        %v408 = vld [vmem:[#allocation6 + $0x250] sm:$0xff]
        %v409 = vld [vmem:[#allocation6 + $0x258] sm:$0xff]
        %v410 = vld [vmem:[#allocation6 + $0x260] sm:$0xff]
        %v411 = vld [vmem:[#allocation6 + $0x268] sm:$0xff]
        %v412 = vld [vmem:[#allocation6 + $0x270] sm:$0xff]
        %v413 = vld [vmem:[#allocation6 + $0x278] sm:$0xff]
        %v414 = vld [vmem:[#allocation6 + $0x280] sm:$0xff]
        %v415 = vld [vmem:[#allocation6 + $0x288] sm:$0xff]
        %v416 = vld [vmem:[#allocation6 + $0x290] sm:$0xff]
        %v417 = vld [vmem:[#allocation6 + $0x298] sm:$0xff]
        %v418 = vld [vmem:[#allocation6 + $0x2a0] sm:$0xff]
        %v419 = vld [vmem:[#allocation6 + $0x2a8] sm:$0xff]
        %v420 = vld [vmem:[#allocation6 + $0x2b0] sm:$0xff]
        %v421 = vld [vmem:[#allocation6 + $0x2b8] sm:$0xff]
        %v422 = vld [vmem:[#allocation6 + $0x2c0] sm:$0xff]
        %v423 = vld [vmem:[#allocation6 + $0x2c8] sm:$0xff]
        %v424 = vld [vmem:[#allocation6 + $0x2d0] sm:$0xff]
        %v425 = vld [vmem:[#allocation6 + $0x2d8] sm:$0xff]
        %v426 = vld [vmem:[#allocation6 + $0x2e0] sm:$0xff]
        %v427 = vld [vmem:[#allocation6 + $0x2e8] sm:$0xff]
        %v428 = vld [vmem:[#allocation6 + $0x2f0] sm:$0xff]
        %v429 = vld [vmem:[#allocation6 + $0x2f8] sm:$0xff]
        %v430 = vld [vmem:[#allocation8] sm:$0x3f]
        %v432 = vlaneseq
        %v433 = vshrl.u32 %v432, 7
        %v434 = vsub.s32 0, %v433
        %v435 = vrot.slane %v430, %v434
        %v436 = vlaneseq
        %v437 = vshrl.u32 %v436, 7
        %v438 = vsub.s32 1, %v437
        %v439 = vrot.slane %v430, %v438
        %v440 = vlaneseq
        %v441 = vshrl.u32 %v440, 7
        %v442 = vsub.s32 2, %v441
        %v443 = vrot.slane %v430, %v442
        %v444 = vlaneseq
        %v445 = vshrl.u32 %v444, 7
        %v446 = vsub.s32 3, %v445
        %v447 = vrot.slane %v430, %v446
        %v448 = vlaneseq
        %v449 = vshrl.u32 %v448, 7
        %v450 = vsub.s32 4, %v449
        %v451 = vrot.slane %v430, %v450
        %v452 = vlaneseq
        %v453 = vshrl.u32 %v452, 7
        %v454 = vsub.s32 5, %v453
        %v455 = vrot.slane %v430, %v454
        %v558 = vunpack.c.l.b16 %v334
        %v559 = vunpack.c.h.b16 %v334
        %v560 = vunpack.c.l.b16 %v335
        %v561 = vunpack.c.h.b16 %v335
        %v562 = vunpack.c.l.b16 %v336
        %v563 = vunpack.c.h.b16 %v336
        %v564 = vunpack.c.l.b16 %v337
        %v565 = vunpack.c.h.b16 %v337
        %v566 = vunpack.c.l.b16 %v338
        %v567 = vunpack.c.h.b16 %v338
        %v568 = vunpack.c.l.b16 %v339
        %v569 = vunpack.c.h.b16 %v339
        %v570 = vunpack.c.l.b16 %v340
        %v571 = vunpack.c.h.b16 %v340
        %v572 = vunpack.c.l.b16 %v341
        %v573 = vunpack.c.h.b16 %v341
        %v574 = vunpack.c.l.b16 %v342
        %v575 = vunpack.c.h.b16 %v342
        %v576 = vunpack.c.l.b16 %v343
        %v577 = vunpack.c.h.b16 %v343
        %v578 = vunpack.c.l.b16 %v344
        %v579 = vunpack.c.h.b16 %v344
        %v580 = vunpack.c.l.b16 %v345
        %v581 = vunpack.c.h.b16 %v345
        %v582 = vunpack.c.l.b16 %v346
        %v583 = vunpack.c.h.b16 %v346
        %v584 = vunpack.c.l.b16 %v347
        %v585 = vunpack.c.h.b16 %v347
        %v586 = vunpack.c.l.b16 %v348
        %v587 = vunpack.c.h.b16 %v348
        %v588 = vunpack.c.l.b16 %v349
        %v589 = vunpack.c.h.b16 %v349
        %v590 = vunpack.c.l.b16 %v350
        %v591 = vunpack.c.h.b16 %v350
        %v592 = vunpack.c.l.b16 %v351
        %v593 = vunpack.c.h.b16 %v351
        %v594 = vunpack.c.l.b16 %v352
        %v595 = vunpack.c.h.b16 %v352
        %v596 = vunpack.c.l.b16 %v353
        %v597 = vunpack.c.h.b16 %v353
        %v598 = vunpack.c.l.b16 %v354
        %v599 = vunpack.c.h.b16 %v354
        %v600 = vunpack.c.l.b16 %v355
        %v601 = vunpack.c.h.b16 %v355
        %v602 = vunpack.c.l.b16 %v356
        %v603 = vunpack.c.h.b16 %v356
        %v604 = vunpack.c.l.b16 %v357
        %v605 = vunpack.c.h.b16 %v357
        %v606 = vunpack.c.l.b16 %v358
        %v607 = vunpack.c.h.b16 %v358
        %v608 = vunpack.c.l.b16 %v359
        %v609 = vunpack.c.h.b16 %v359
        %v610 = vunpack.c.l.b16 %v360
        %v611 = vunpack.c.h.b16 %v360
        %v612 = vunpack.c.l.b16 %v361
        %v613 = vunpack.c.h.b16 %v361
        %v614 = vunpack.c.l.b16 %v362
        %v615 = vunpack.c.h.b16 %v362
        %v616 = vunpack.c.l.b16 %v363
        %v617 = vunpack.c.h.b16 %v363
        %v618 = vunpack.c.l.b16 %v364
        %v619 = vunpack.c.h.b16 %v364
        %v620 = vunpack.c.l.b16 %v365
        %v621 = vunpack.c.h.b16 %v365
        %v622 = vunpack.c.l.b16 %v366
        %v623 = vunpack.c.h.b16 %v366
        %v624 = vunpack.c.l.b16 %v367
        %v625 = vunpack.c.h.b16 %v367
        %v626 = vunpack.c.l.b16 %v368
        %v627 = vunpack.c.h.b16 %v368
        %v628 = vunpack.c.l.b16 %v369
        %v629 = vunpack.c.h.b16 %v369
        %v630 = vunpack.c.l.b16 %v370
        %v631 = vunpack.c.h.b16 %v370
        %v632 = vunpack.c.l.b16 %v371
        %v633 = vunpack.c.h.b16 %v371
        %v634 = vunpack.c.l.b16 %v372
        %v635 = vunpack.c.h.b16 %v372
        %v636 = vunpack.c.l.b16 %v373
        %v637 = vunpack.c.h.b16 %v373
        %v638 = vunpack.c.l.b16 %v374
        %v639 = vunpack.c.h.b16 %v374
        %v640 = vunpack.c.l.b16 %v375
        %v641 = vunpack.c.h.b16 %v375
        %v642 = vunpack.c.l.b16 %v376
        %v643 = vunpack.c.h.b16 %v376
        %v644 = vunpack.c.l.b16 %v377
        %v645 = vunpack.c.h.b16 %v377
        %v646 = vunpack.c.l.b16 %v378
        %v647 = vunpack.c.h.b16 %v378
        %v648 = vunpack.c.l.b16 %v379
        %v649 = vunpack.c.h.b16 %v379
        %v650 = vunpack.c.l.b16 %v380
        %v651 = vunpack.c.h.b16 %v380
        %v652 = vunpack.c.l.b16 %v381
        %v653 = vunpack.c.h.b16 %v381
        %v654 = vunpack.c.l.b16 %v382
        %v655 = vunpack.c.h.b16 %v382
        %v656 = vunpack.c.l.b16 %v383
        %v657 = vunpack.c.h.b16 %v383
        %v658 = vunpack.c.l.b16 %v384
        %v659 = vunpack.c.h.b16 %v384
        %v660 = vunpack.c.l.b16 %v385
        %v661 = vunpack.c.h.b16 %v385
        %v662 = vunpack.c.l.b16 %v386
        %v663 = vunpack.c.h.b16 %v386
        %v664 = vunpack.c.l.b16 %v387
        %v665 = vunpack.c.h.b16 %v387
        %v666 = vunpack.c.l.b16 %v388
        %v667 = vunpack.c.h.b16 %v388
        %v668 = vunpack.c.l.b16 %v389
        %v669 = vunpack.c.h.b16 %v389
        %v670 = vunpack.c.l.b16 %v390
        %v671 = vunpack.c.h.b16 %v390
        %v672 = vunpack.c.l.b16 %v391
        %v673 = vunpack.c.h.b16 %v391
        %v674 = vunpack.c.l.b16 %v392
        %v675 = vunpack.c.h.b16 %v392
        %v676 = vunpack.c.l.b16 %v393
        %v677 = vunpack.c.h.b16 %v393
        %v678 = vunpack.c.l.b16 %v394
        %v679 = vunpack.c.h.b16 %v394
        %v680 = vunpack.c.l.b16 %v395
        %v681 = vunpack.c.h.b16 %v395
        %v682 = vunpack.c.l.b16 %v396
        %v683 = vunpack.c.h.b16 %v396
        %v684 = vunpack.c.l.b16 %v397
        %v685 = vunpack.c.h.b16 %v397
        %v686 = vunpack.c.l.b16 %v398
        %v687 = vunpack.c.h.b16 %v398
        %v688 = vunpack.c.l.b16 %v399
        %v689 = vunpack.c.h.b16 %v399
        %v690 = vunpack.c.l.b16 %v400
        %v691 = vunpack.c.h.b16 %v400
        %v692 = vunpack.c.l.b16 %v401
        %v693 = vunpack.c.h.b16 %v401
        %v694 = vunpack.c.l.b16 %v402
        %v695 = vunpack.c.h.b16 %v402
        %v696 = vunpack.c.l.b16 %v403
        %v697 = vunpack.c.h.b16 %v403
        %v698 = vunpack.c.l.b16 %v404
        %v699 = vunpack.c.h.b16 %v404
        %v700 = vunpack.c.l.b16 %v405
        %v701 = vunpack.c.h.b16 %v405
        %v702 = vunpack.c.l.b16 %v406
        %v703 = vunpack.c.h.b16 %v406
        %v704 = vunpack.c.l.b16 %v407
        %v705 = vunpack.c.h.b16 %v407
        %v706 = vunpack.c.l.b16 %v408
        %v707 = vunpack.c.h.b16 %v408
        %v708 = vunpack.c.l.b16 %v409
        %v709 = vunpack.c.h.b16 %v409
        %v710 = vunpack.c.l.b16 %v410
        %v711 = vunpack.c.h.b16 %v410
        %v712 = vunpack.c.l.b16 %v411
        %v713 = vunpack.c.h.b16 %v411
        %v714 = vunpack.c.l.b16 %v412
        %v715 = vunpack.c.h.b16 %v412
        %v716 = vunpack.c.l.b16 %v413
        %v717 = vunpack.c.h.b16 %v413
        %v718 = vunpack.c.l.b16 %v414
        %v719 = vunpack.c.h.b16 %v414
        %v720 = vunpack.c.l.b16 %v415
        %v721 = vunpack.c.h.b16 %v415
        %v722 = vunpack.c.l.b16 %v416
        %v723 = vunpack.c.h.b16 %v416
        %v724 = vunpack.c.l.b16 %v417
        %v725 = vunpack.c.h.b16 %v417
        %v726 = vunpack.c.l.b16 %v418
        %v727 = vunpack.c.h.b16 %v418
        %v728 = vunpack.c.l.b16 %v419
        %v729 = vunpack.c.h.b16 %v419
        %v730 = vunpack.c.l.b16 %v420
        %v731 = vunpack.c.h.b16 %v420
        %v732 = vunpack.c.l.b16 %v421
        %v733 = vunpack.c.h.b16 %v421
        %v734 = vunpack.c.l.b16 %v422
        %v735 = vunpack.c.h.b16 %v422
        %v736 = vunpack.c.l.b16 %v423
        %v737 = vunpack.c.h.b16 %v423
        %v738 = vunpack.c.l.b16 %v424
        %v739 = vunpack.c.h.b16 %v424
        %v740 = vunpack.c.l.b16 %v425
        %v741 = vunpack.c.h.b16 %v425
        %v742 = vunpack.c.l.b16 %v426
        %v743 = vunpack.c.h.b16 %v426
        %v744 = vunpack.c.l.b16 %v427
        %v745 = vunpack.c.h.b16 %v427
        %v746 = vunpack.c.l.b16 %v428
        %v747 = vunpack.c.h.b16 %v428
        %v748 = vunpack.c.l.b16 %v429
        %v749 = vunpack.c.h.b16 %v429
        %v750 = vpack.c.b16 %v564, %v558
        %v751 = vpack.c.b16 %v565, %v559
        %v752 = vpack.c.b16 %v566, %v560
        %v753 = vpack.c.b16 %v567, %v561
        %v754 = vpack.c.b16 %v568, %v562
        %v755 = vpack.c.b16 %v569, %v563
        %v756 = vpack.c.b16 %v576, %v570
        %v757 = vpack.c.b16 %v577, %v571
        %v758 = vpack.c.b16 %v578, %v572
        %v759 = vpack.c.b16 %v579, %v573
        %v760 = vpack.c.b16 %v580, %v574
        %v761 = vpack.c.b16 %v581, %v575
        %v762 = vpack.c.b16 %v588, %v582
        %v763 = vpack.c.b16 %v589, %v583
        %v764 = vpack.c.b16 %v590, %v584
        %v765 = vpack.c.b16 %v591, %v585
        %v766 = vpack.c.b16 %v592, %v586
        %v767 = vpack.c.b16 %v593, %v587
        %v768 = vpack.c.b16 %v600, %v594
        %v769 = vpack.c.b16 %v601, %v595
        %v770 = vpack.c.b16 %v602, %v596
        %v771 = vpack.c.b16 %v603, %v597
        %v772 = vpack.c.b16 %v604, %v598
        %v773 = vpack.c.b16 %v605, %v599
        %v774 = vpack.c.b16 %v612, %v606
        %v775 = vpack.c.b16 %v613, %v607
        %v776 = vpack.c.b16 %v614, %v608
        %v777 = vpack.c.b16 %v615, %v609
        %v778 = vpack.c.b16 %v616, %v610
        %v779 = vpack.c.b16 %v617, %v611
        %v780 = vpack.c.b16 %v624, %v618
        %v781 = vpack.c.b16 %v625, %v619
        %v782 = vpack.c.b16 %v626, %v620
        %v783 = vpack.c.b16 %v627, %v621
        %v784 = vpack.c.b16 %v628, %v622
        %v785 = vpack.c.b16 %v629, %v623
        %v786 = vpack.c.b16 %v636, %v630
        %v787 = vpack.c.b16 %v637, %v631
        %v788 = vpack.c.b16 %v638, %v632
        %v789 = vpack.c.b16 %v639, %v633
        %v790 = vpack.c.b16 %v640, %v634
        %v791 = vpack.c.b16 %v641, %v635
        %v792 = vpack.c.b16 %v648, %v642
        %v793 = vpack.c.b16 %v649, %v643
        %v794 = vpack.c.b16 %v650, %v644
        %v795 = vpack.c.b16 %v651, %v645
        %v796 = vpack.c.b16 %v652, %v646
        %v797 = vpack.c.b16 %v653, %v647
        %v798 = vpack.c.b16 %v660, %v654
        %v799 = vpack.c.b16 %v661, %v655
        %v800 = vpack.c.b16 %v662, %v656
        %v801 = vpack.c.b16 %v663, %v657
        %v802 = vpack.c.b16 %v664, %v658
        %v803 = vpack.c.b16 %v665, %v659
        %v804 = vpack.c.b16 %v672, %v666
        %v805 = vpack.c.b16 %v673, %v667
        %v806 = vpack.c.b16 %v674, %v668
        %v807 = vpack.c.b16 %v675, %v669
        %v808 = vpack.c.b16 %v676, %v670
        %v809 = vpack.c.b16 %v677, %v671
        %v810 = vpack.c.b16 %v684, %v678
        %v811 = vpack.c.b16 %v685, %v679
        %v812 = vpack.c.b16 %v686, %v680
        %v813 = vpack.c.b16 %v687, %v681
        %v814 = vpack.c.b16 %v688, %v682
        %v815 = vpack.c.b16 %v689, %v683
        %v816 = vpack.c.b16 %v696, %v690
        %v817 = vpack.c.b16 %v697, %v691
        %v818 = vpack.c.b16 %v698, %v692
        %v819 = vpack.c.b16 %v699, %v693
        %v820 = vpack.c.b16 %v700, %v694
        %v821 = vpack.c.b16 %v701, %v695
        %v822 = vpack.c.b16 %v708, %v702
        %v823 = vpack.c.b16 %v709, %v703
        %v824 = vpack.c.b16 %v710, %v704
        %v825 = vpack.c.b16 %v711, %v705
        %v826 = vpack.c.b16 %v712, %v706
        %v827 = vpack.c.b16 %v713, %v707
        %v828 = vpack.c.b16 %v720, %v714
        %v829 = vpack.c.b16 %v721, %v715
        %v830 = vpack.c.b16 %v722, %v716
        %v831 = vpack.c.b16 %v723, %v717
        %v832 = vpack.c.b16 %v724, %v718
        %v833 = vpack.c.b16 %v725, %v719
        %v834 = vpack.c.b16 %v732, %v726
        %v835 = vpack.c.b16 %v733, %v727
        %v836 = vpack.c.b16 %v734, %v728
        %v837 = vpack.c.b16 %v735, %v729
        %v838 = vpack.c.b16 %v736, %v730
        %v839 = vpack.c.b16 %v737, %v731
        %v840 = vpack.c.b16 %v744, %v738
        %v841 = vpack.c.b16 %v745, %v739
        %v842 = vpack.c.b16 %v746, %v740
        %v843 = vpack.c.b16 %v747, %v741
        %v844 = vpack.c.b16 %v748, %v742
        %v845 = vpack.c.b16 %v749, %v743
        %942 = vmatprep.subr.bf16.mxu0 %v793
        %943 = vmatpush1.bf16.msra.mxu0 %v792
        %944 = vmatprep.subr.bf16.mxu0 %v787
        %945 = vmatpush1.bf16.msra.mxu0 %v786
        %946 = vmatprep.subr.bf16.mxu0 %v781
        %947 = vmatpush1.bf16.msra.mxu0 %v780
        %948 = vmatprep.subr.bf16.mxu0 %v775
        %949 = vmatpush1.bf16.msra.mxu0 %v774
        %950 = vmatprep.subr.bf16.mxu0 %v769
        %951 = vmatpush1.bf16.msra.mxu0 %v768
        %952 = vmatprep.subr.bf16.mxu0 %v763
        %953 = vmatpush1.bf16.msra.mxu0 %v762
        %954 = vmatprep.subr.bf16.mxu0 %v757
        %955 = vmatpush1.bf16.msra.mxu0 %v756
        %956 = vmatprep.subr.bf16.mxu0 %v751
        %957 = vmatpush1.bf16.msra.mxu0 %v750
        %958 = vmatprep.subr.bf16.mxu0 %v841
        %959 = vmatpush2.bf16.msra.mxu0 %v840
        %960 = vmatprep.subr.bf16.mxu0 %v835
        %961 = vmatpush2.bf16.msra.mxu0 %v834
        %962 = vmatprep.subr.bf16.mxu0 %v829
        %963 = vmatpush2.bf16.msra.mxu0 %v828
        %964 = vmatprep.subr.bf16.mxu0 %v823
        %965 = vmatpush2.bf16.msra.mxu0 %v822
        %966 = vmatprep.subr.bf16.mxu0 %v817
        %967 = vmatpush2.bf16.msra.mxu0 %v816
        %968 = vmatprep.subr.bf16.mxu0 %v811
        %969 = vmatpush2.bf16.msra.mxu0 %v810
        %970 = vmatprep.subr.bf16.mxu0 %v805
        %971 = vmatpush2.bf16.msra.mxu0 %v804
        %972 = vmatprep.subr.bf16.mxu0 %v799
        %973 = vmatpush2.bf16.msra.mxu0 %v798
        %974 = vmatprep.mubr.bf16.mxu0 %v319
        %975 = vmatmul.mubr.bf16.gmra.mxu0 %v318
        %v976 = vpop.f32.mrf.mxu0
        %v977 = vadd.f32 %v435, %v976
        %v978 = vpop.f32.mrf.mxu0
        %v979 = vadd.f32 %v439, %v978
        %v980 = vpop.f32.mrf.mxu0
        %v981 = vadd.f32 %v435, %v980
        %v982 = vpop.f32.mrf.mxu0
        %v983 = vadd.f32 %v439, %v982
        %984 = vmatprep.mubr.bf16.mxu0 %v321
        %985 = vmatmul.mubr.bf16.gmra.mxu0 %v320
        %v986 = vpop.f32.mrf.mxu0
        %v987 = vadd.f32 %v435, %v986
        %v988 = vpop.f32.mrf.mxu0
        %v989 = vadd.f32 %v439, %v988
        %v990 = vpop.f32.mrf.mxu0
        %v991 = vadd.f32 %v435, %v990
        %v992 = vpop.f32.mrf.mxu0
        %v993 = vadd.f32 %v439, %v992
        %994 = vmatprep.mubr.bf16.mxu0 %v323
        %995 = vmatmul.mubr.bf16.gmra.mxu0 %v322
        %v996 = vpop.f32.mrf.mxu0
        %v997 = vadd.f32 %v435, %v996
        %v998 = vpop.f32.mrf.mxu0
        %v999 = vadd.f32 %v439, %v998
        %v1000 = vpop.f32.mrf.mxu0
        %v1001 = vadd.f32 %v435, %v1000
        %v1002 = vpop.f32.mrf.mxu0
        %v1003 = vadd.f32 %v439, %v1002
        %1004 = vmatprep.mubr.bf16.mxu0 %v325
        %1005 = vmatmul.mubr.bf16.gmra.mxu0 %v324
        %v1006 = vpop.f32.mrf.mxu0
        %v1007 = vadd.f32 %v435, %v1006
        %v1008 = vpop.f32.mrf.mxu0
        %v1009 = vadd.f32 %v439, %v1008
        %v1010 = vpop.f32.mrf.mxu0
        %v1011 = vadd.f32 %v435, %v1010
        %v1012 = vpop.f32.mrf.mxu0
        %v1013 = vadd.f32 %v439, %v1012
        %1014 = vmatprep.mubr.bf16.mxu0 %v327
        %1015 = vmatmul.mubr.bf16.gmra.mxu0 %v326
        %v1016 = vpop.f32.mrf.mxu0
        %v1017 = vadd.f32 %v435, %v1016
        %v1018 = vpop.f32.mrf.mxu0
        %v1019 = vadd.f32 %v439, %v1018
        %v1020 = vpop.f32.mrf.mxu0
        %v1021 = vadd.f32 %v435, %v1020
        %v1022 = vpop.f32.mrf.mxu0
        %v1023 = vadd.f32 %v439, %v1022
        %1024 = vmatprep.mubr.bf16.mxu0 %v329
        %1025 = vmatmul.mubr.bf16.gmra.mxu0 %v328
        %v1026 = vpop.f32.mrf.mxu0
        %v1027 = vadd.f32 %v435, %v1026
        %v1028 = vpop.f32.mrf.mxu0
        %v1029 = vadd.f32 %v439, %v1028
        %v1030 = vpop.f32.mrf.mxu0
        %v1031 = vadd.f32 %v435, %v1030
        %v1032 = vpop.f32.mrf.mxu0
        %v1033 = vadd.f32 %v439, %v1032
        %1034 = vmatprep.mubr.bf16.mxu0 %v331
        %1035 = vmatmul.mubr.bf16.gmra.mxu0 %v330
        %v1036 = vpop.f32.mrf.mxu0
        %v1037 = vadd.f32 %v435, %v1036
        %v1038 = vpop.f32.mrf.mxu0
        %v1039 = vadd.f32 %v439, %v1038
        %v1040 = vpop.f32.mrf.mxu0
        %v1041 = vadd.f32 %v435, %v1040
        %v1042 = vpop.f32.mrf.mxu0
        %v1043 = vadd.f32 %v439, %v1042
        %1044 = vmatprep.mubr.bf16.mxu0 %v333
        %1045 = vmatmul.mubr.bf16.gmra.mxu0 %v332
        %v1046 = vpop.f32.mrf.mxu0
        %v1047 = vadd.f32 %v435, %v1046
        %v1048 = vpop.f32.mrf.mxu0
        %v1049 = vadd.f32 %v439, %v1048
        %v1050 = vpop.f32.mrf.mxu0
        %v1051 = vadd.f32 %v435, %v1050
        %v1052 = vpop.f32.mrf.mxu0
        %v1053 = vadd.f32 %v439, %v1052
        %1054 = vdwg.mxu0
        %1055 = vmatprep.subr.bf16.mxu0 %v795
        %1056 = vmatpush1.bf16.msra.mxu0 %v794
        %1057 = vmatprep.subr.bf16.mxu0 %v789
        %1058 = vmatpush1.bf16.msra.mxu0 %v788
        %1059 = vmatprep.subr.bf16.mxu0 %v783
        %1060 = vmatpush1.bf16.msra.mxu0 %v782
        %1061 = vmatprep.subr.bf16.mxu0 %v777
        %1062 = vmatpush1.bf16.msra.mxu0 %v776
        %1063 = vmatprep.subr.bf16.mxu0 %v771
        %1064 = vmatpush1.bf16.msra.mxu0 %v770
        %1065 = vmatprep.subr.bf16.mxu0 %v765
        %1066 = vmatpush1.bf16.msra.mxu0 %v764
        %1067 = vmatprep.subr.bf16.mxu0 %v759
        %1068 = vmatpush1.bf16.msra.mxu0 %v758
        %1069 = vmatprep.subr.bf16.mxu0 %v753
        %1070 = vmatpush1.bf16.msra.mxu0 %v752
        %1071 = vmatprep.subr.bf16.mxu0 %v843
        %1072 = vmatpush2.bf16.msra.mxu0 %v842
        %1073 = vmatprep.subr.bf16.mxu0 %v837
        %1074 = vmatpush2.bf16.msra.mxu0 %v836
        %1075 = vmatprep.subr.bf16.mxu0 %v831
        %1076 = vmatpush2.bf16.msra.mxu0 %v830
        %1077 = vmatprep.subr.bf16.mxu0 %v825
        %1078 = vmatpush2.bf16.msra.mxu0 %v824
        %1079 = vmatprep.subr.bf16.mxu0 %v819
        %1080 = vmatpush2.bf16.msra.mxu0 %v818
        %1081 = vmatprep.subr.bf16.mxu0 %v813
        %1082 = vmatpush2.bf16.msra.mxu0 %v812
        %1083 = vmatprep.subr.bf16.mxu0 %v807
        %1084 = vmatpush2.bf16.msra.mxu0 %v806
        %1085 = vmatprep.subr.bf16.mxu0 %v801
        %1086 = vmatpush2.bf16.msra.mxu0 %v800
        %1087 = vmatprep.mubr.bf16.mxu0 %v319
        %1088 = vmatmul.mubr.bf16.gmra.mxu0 %v318
        %v1089 = vpop.f32.mrf.mxu0
        %v1090 = vadd.f32 %v443, %v1089
        %v1091 = vpop.f32.mrf.mxu0
        %v1092 = vadd.f32 %v447, %v1091
        %v1093 = vpop.f32.mrf.mxu0
        %v1094 = vadd.f32 %v443, %v1093
        %v1095 = vpop.f32.mrf.mxu0
        %v1096 = vadd.f32 %v447, %v1095
        %1097 = vmatprep.mubr.bf16.mxu0 %v321
        %1098 = vmatmul.mubr.bf16.gmra.mxu0 %v320
        %v1099 = vpop.f32.mrf.mxu0
        %v1100 = vadd.f32 %v443, %v1099
        %v1101 = vpop.f32.mrf.mxu0
        %v1102 = vadd.f32 %v447, %v1101
        %v1103 = vpop.f32.mrf.mxu0
        %v1104 = vadd.f32 %v443, %v1103
        %v1105 = vpop.f32.mrf.mxu0
        %v1106 = vadd.f32 %v447, %v1105
        %1107 = vmatprep.mubr.bf16.mxu0 %v323
        %1108 = vmatmul.mubr.bf16.gmra.mxu0 %v322
        %v1109 = vpop.f32.mrf.mxu0
        %v1110 = vadd.f32 %v443, %v1109
        %v1111 = vpop.f32.mrf.mxu0
        %v1112 = vadd.f32 %v447, %v1111
        %v1113 = vpop.f32.mrf.mxu0
        %v1114 = vadd.f32 %v443, %v1113
        %v1115 = vpop.f32.mrf.mxu0
        %v1116 = vadd.f32 %v447, %v1115
        %1117 = vmatprep.mubr.bf16.mxu0 %v325
        %1118 = vmatmul.mubr.bf16.gmra.mxu0 %v324
        %v1119 = vpop.f32.mrf.mxu0
        %v1120 = vadd.f32 %v443, %v1119
        %v1121 = vpop.f32.mrf.mxu0
        %v1122 = vadd.f32 %v447, %v1121
        %v1123 = vpop.f32.mrf.mxu0
        %v1124 = vadd.f32 %v443, %v1123
        %v1125 = vpop.f32.mrf.mxu0
        %v1126 = vadd.f32 %v447, %v1125
        %1127 = vmatprep.mubr.bf16.mxu0 %v327
        %1128 = vmatmul.mubr.bf16.gmra.mxu0 %v326
        %v1129 = vpop.f32.mrf.mxu0
        %v1130 = vadd.f32 %v443, %v1129
        %v1131 = vpop.f32.mrf.mxu0
        %v1132 = vadd.f32 %v447, %v1131
        %v1133 = vpop.f32.mrf.mxu0
        %v1134 = vadd.f32 %v443, %v1133
        %v1135 = vpop.f32.mrf.mxu0
        %v1136 = vadd.f32 %v447, %v1135
        %1137 = vmatprep.mubr.bf16.mxu0 %v329
        %1138 = vmatmul.mubr.bf16.gmra.mxu0 %v328
        %v1139 = vpop.f32.mrf.mxu0
        %v1140 = vadd.f32 %v443, %v1139
        %v1141 = vpop.f32.mrf.mxu0
        %v1142 = vadd.f32 %v447, %v1141
        %v1143 = vpop.f32.mrf.mxu0
        %v1144 = vadd.f32 %v443, %v1143
        %v1145 = vpop.f32.mrf.mxu0
        %v1146 = vadd.f32 %v447, %v1145
        %1147 = vmatprep.mubr.bf16.mxu0 %v331
        %1148 = vmatmul.mubr.bf16.gmra.mxu0 %v330
        %v1149 = vpop.f32.mrf.mxu0
        %v1150 = vadd.f32 %v443, %v1149
        %v1151 = vpop.f32.mrf.mxu0
        %v1152 = vadd.f32 %v447, %v1151
        %v1153 = vpop.f32.mrf.mxu0
        %v1154 = vadd.f32 %v443, %v1153
        %v1155 = vpop.f32.mrf.mxu0
        %v1156 = vadd.f32 %v447, %v1155
        %1157 = vmatprep.mubr.bf16.mxu0 %v333
        %1158 = vmatmul.mubr.bf16.gmra.mxu0 %v332
        %v1159 = vpop.f32.mrf.mxu0
        %v1160 = vadd.f32 %v443, %v1159
        %v1161 = vpop.f32.mrf.mxu0
        %v1162 = vadd.f32 %v447, %v1161
        %v1163 = vpop.f32.mrf.mxu0
        %v1164 = vadd.f32 %v443, %v1163
        %v1165 = vpop.f32.mrf.mxu0
        %v1166 = vadd.f32 %v447, %v1165
        %1167 = vdwg.mxu0
        %1168 = vmatprep.subr.bf16.mxu0 %v797
        %1169 = vmatpush1.bf16.msra.mxu0 %v796
        %1170 = vmatprep.subr.bf16.mxu0 %v791
        %1171 = vmatpush1.bf16.msra.mxu0 %v790
        %1172 = vmatprep.subr.bf16.mxu0 %v785
        %1173 = vmatpush1.bf16.msra.mxu0 %v784
        %1174 = vmatprep.subr.bf16.mxu0 %v779
        %1175 = vmatpush1.bf16.msra.mxu0 %v778
        %1176 = vmatprep.subr.bf16.mxu0 %v773
        %1177 = vmatpush1.bf16.msra.mxu0 %v772
        %1178 = vmatprep.subr.bf16.mxu0 %v767
        %1179 = vmatpush1.bf16.msra.mxu0 %v766
        %1180 = vmatprep.subr.bf16.mxu0 %v761
        %1181 = vmatpush1.bf16.msra.mxu0 %v760
        %1182 = vmatprep.subr.bf16.mxu0 %v755
        %1183 = vmatpush1.bf16.msra.mxu0 %v754
        %1184 = vmatprep.subr.bf16.mxu0 %v845
        %1185 = vmatpush2.bf16.msra.mxu0 %v844
        %1186 = vmatprep.subr.bf16.mxu0 %v839
        %1187 = vmatpush2.bf16.msra.mxu0 %v838
        %1188 = vmatprep.subr.bf16.mxu0 %v833
        %1189 = vmatpush2.bf16.msra.mxu0 %v832
        %1190 = vmatprep.subr.bf16.mxu0 %v827
        %1191 = vmatpush2.bf16.msra.mxu0 %v826
        %1192 = vmatprep.subr.bf16.mxu0 %v821
        %1193 = vmatpush2.bf16.msra.mxu0 %v820
        %1194 = vmatprep.subr.bf16.mxu0 %v815
        %1195 = vmatpush2.bf16.msra.mxu0 %v814
        %1196 = vmatprep.subr.bf16.mxu0 %v809
        %1197 = vmatpush2.bf16.msra.mxu0 %v808
        %1198 = vmatprep.subr.bf16.mxu0 %v803
        %1199 = vmatpush2.bf16.msra.mxu0 %v802
        %1200 = vmatprep.mubr.bf16.mxu0 %v319
        %1201 = vmatmul.mubr.bf16.gmra.mxu0 %v318
        %v1202 = vpop.f32.mrf.mxu0
        %v1203 = vadd.f32 %v451, %v1202
        %v1204 = vpop.f32.mrf.mxu0
        %v1205 = vadd.f32 %v455, %v1204
        %v1206 = vpop.f32.mrf.mxu0
        %v1207 = vadd.f32 %v451, %v1206
        %v1208 = vpop.f32.mrf.mxu0
        %v1209 = vadd.f32 %v455, %v1208
        %1210 = vmatprep.mubr.bf16.mxu0 %v321
        %1211 = vmatmul.mubr.bf16.gmra.mxu0 %v320
        %v1212 = vpop.f32.mrf.mxu0
        %v1213 = vadd.f32 %v451, %v1212
        %v1214 = vpop.f32.mrf.mxu0
        %v1215 = vadd.f32 %v455, %v1214
        %v1216 = vpop.f32.mrf.mxu0
        %v1217 = vadd.f32 %v451, %v1216
        %v1218 = vpop.f32.mrf.mxu0
        %v1219 = vadd.f32 %v455, %v1218
        %1220 = vmatprep.mubr.bf16.mxu0 %v323
        %1221 = vmatmul.mubr.bf16.gmra.mxu0 %v322
        %v1222 = vpop.f32.mrf.mxu0
        %v1223 = vadd.f32 %v451, %v1222
        %v1224 = vpop.f32.mrf.mxu0
        %v1225 = vadd.f32 %v455, %v1224
        %v1226 = vpop.f32.mrf.mxu0
        %v1227 = vadd.f32 %v451, %v1226
        %v1228 = vpop.f32.mrf.mxu0
        %v1229 = vadd.f32 %v455, %v1228
        %1230 = vmatprep.mubr.bf16.mxu0 %v325
        %1231 = vmatmul.mubr.bf16.gmra.mxu0 %v324
        %v1232 = vpop.f32.mrf.mxu0
        %v1233 = vadd.f32 %v451, %v1232
        %v1234 = vpop.f32.mrf.mxu0
        %v1235 = vadd.f32 %v455, %v1234
        %v1236 = vpop.f32.mrf.mxu0
        %v1237 = vadd.f32 %v451, %v1236
        %v1238 = vpop.f32.mrf.mxu0
        %v1239 = vadd.f32 %v455, %v1238
        %1240 = vmatprep.mubr.bf16.mxu0 %v327
        %1241 = vmatmul.mubr.bf16.gmra.mxu0 %v326
        %v1242 = vpop.f32.mrf.mxu0
        %v1243 = vadd.f32 %v451, %v1242
        %v1244 = vpop.f32.mrf.mxu0
        %v1245 = vadd.f32 %v455, %v1244
        %v1246 = vpop.f32.mrf.mxu0
        %v1247 = vadd.f32 %v451, %v1246
        %v1248 = vpop.f32.mrf.mxu0
        %v1249 = vadd.f32 %v455, %v1248
        %1250 = vmatprep.mubr.bf16.mxu0 %v329
        %1251 = vmatmul.mubr.bf16.gmra.mxu0 %v328
        %v1252 = vpop.f32.mrf.mxu0
        %v1253 = vadd.f32 %v451, %v1252
        %v1254 = vpop.f32.mrf.mxu0
        %v1255 = vadd.f32 %v455, %v1254
        %v1256 = vpop.f32.mrf.mxu0
        %v1257 = vadd.f32 %v451, %v1256
        %v1258 = vpop.f32.mrf.mxu0
        %v1259 = vadd.f32 %v455, %v1258
        %1260 = vmatprep.mubr.bf16.mxu0 %v331
        %1261 = vmatmul.mubr.bf16.gmra.mxu0 %v330
        %v1262 = vpop.f32.mrf.mxu0
        %v1263 = vadd.f32 %v451, %v1262
        %v1264 = vpop.f32.mrf.mxu0
        %v1265 = vadd.f32 %v455, %v1264
        %v1266 = vpop.f32.mrf.mxu0
        %v1267 = vadd.f32 %v451, %v1266
        %v1268 = vpop.f32.mrf.mxu0
        %v1269 = vadd.f32 %v455, %v1268
        %1270 = vmatprep.mubr.bf16.mxu0 %v333
        %1271 = vmatmul.mubr.bf16.gmra.mxu0 %v332
        %v1272 = vpop.f32.mrf.mxu0
        %v1273 = vadd.f32 %v451, %v1272
        %v1274 = vpop.f32.mrf.mxu0
        %v1275 = vadd.f32 %v455, %v1274
        %v1276 = vpop.f32.mrf.mxu0
        %v1277 = vadd.f32 %v451, %v1276
        %v1278 = vpop.f32.mrf.mxu0
        %v1279 = vadd.f32 %v455, %v1278
        %1280 = vdwg.mxu0
        %v1281 = vpack.c.bf16 %v981, %v977
        %v1282 = vpack.c.bf16 %v983, %v979
        %v1283 = vpack.c.bf16 %v991, %v987
        %v1284 = vpack.c.bf16 %v993, %v989
        %v1285 = vpack.c.bf16 %v1001, %v997
        %v1286 = vpack.c.bf16 %v1003, %v999
        %v1287 = vpack.c.bf16 %v1011, %v1007
        %v1288 = vpack.c.bf16 %v1013, %v1009
        %v1289 = vpack.c.bf16 %v1021, %v1017
        %v1290 = vpack.c.bf16 %v1023, %v1019
        %v1291 = vpack.c.bf16 %v1031, %v1027
        %v1292 = vpack.c.bf16 %v1033, %v1029
        %v1293 = vpack.c.bf16 %v1041, %v1037
        %v1294 = vpack.c.bf16 %v1043, %v1039
        %v1295 = vpack.c.bf16 %v1051, %v1047
        %v1296 = vpack.c.bf16 %v1053, %v1049
        %v1297 = vpack.c.bf16 %v1094, %v1090
        %v1298 = vpack.c.bf16 %v1096, %v1092
        %v1299 = vpack.c.bf16 %v1104, %v1100
        %v1300 = vpack.c.bf16 %v1106, %v1102
        %v1301 = vpack.c.bf16 %v1114, %v1110
        %v1302 = vpack.c.bf16 %v1116, %v1112
        %v1303 = vpack.c.bf16 %v1124, %v1120
        %v1304 = vpack.c.bf16 %v1126, %v1122
        %v1305 = vpack.c.bf16 %v1134, %v1130
        %v1306 = vpack.c.bf16 %v1136, %v1132
        %v1307 = vpack.c.bf16 %v1144, %v1140
        %v1308 = vpack.c.bf16 %v1146, %v1142
        %v1309 = vpack.c.bf16 %v1154, %v1150
        %v1310 = vpack.c.bf16 %v1156, %v1152
        %v1311 = vpack.c.bf16 %v1164, %v1160
        %v1312 = vpack.c.bf16 %v1166, %v1162
        %v1313 = vpack.c.bf16 %v1207, %v1203
        %v1314 = vpack.c.bf16 %v1209, %v1205
        %v1315 = vpack.c.bf16 %v1217, %v1213
        %v1316 = vpack.c.bf16 %v1219, %v1215
        %v1317 = vpack.c.bf16 %v1227, %v1223
        %v1318 = vpack.c.bf16 %v1229, %v1225
        %v1319 = vpack.c.bf16 %v1237, %v1233
        %v1320 = vpack.c.bf16 %v1239, %v1235
        %v1321 = vpack.c.bf16 %v1247, %v1243
        %v1322 = vpack.c.bf16 %v1249, %v1245
        %v1323 = vpack.c.bf16 %v1257, %v1253
        %v1324 = vpack.c.bf16 %v1259, %v1255
        %v1325 = vpack.c.bf16 %v1267, %v1263
        %v1326 = vpack.c.bf16 %v1269, %v1265
        %v1327 = vpack.c.bf16 %v1277, %v1273
        %v1328 = vpack.c.bf16 %v1279, %v1275
        %1329 = vmatprep.subr.bf16.mxu0 0
        %1330 = vmatpush1.bf16.xpose.msra.mxu0 %v1311
        %1331 = vmatprep.subr.bf16.mxu0 0
        %1332 = vmatpush1.bf16.xpose.msra.mxu0 %v1309
        %1333 = vmatprep.subr.bf16.mxu0 0
        %1334 = vmatpush1.bf16.xpose.msra.mxu0 %v1307
        %1335 = vmatprep.subr.bf16.mxu0 0
        %1336 = vmatpush1.bf16.xpose.msra.mxu0 %v1305
        %1337 = vmatprep.subr.bf16.mxu0 0
        %1338 = vmatpush1.bf16.xpose.msra.mxu0 %v1303
        %1339 = vmatprep.subr.bf16.mxu0 0
        %1340 = vmatpush1.bf16.xpose.msra.mxu0 %v1301
        %1341 = vmatprep.subr.bf16.mxu0 0
        %1342 = vmatpush1.bf16.xpose.msra.mxu0 %v1299
        %1343 = vmatprep.subr.bf16.mxu0 0
        %1344 = vmatpush1.bf16.xpose.msra.mxu0 %v1297
        %1345 = vmatprep.subr.bf16.mxu0 0
        %1346 = vmatpush2.bf16.xpose.msra.mxu0 0
        %1347 = vmatprep.subr.bf16.mxu0 0
        %1348 = vmatpush2.bf16.xpose.msra.mxu0 0
        %1349 = vmatprep.subr.bf16.mxu0 0
        %1350 = vmatpush2.bf16.xpose.msra.mxu0 0
        %1351 = vmatprep.subr.bf16.mxu0 0
        %1352 = vmatpush2.bf16.xpose.msra.mxu0 0
        %1353 = vmatprep.subr.bf16.mxu0 0
        %1354 = vmatpush2.bf16.xpose.msra.mxu0 0
        %1355 = vmatprep.subr.bf16.mxu0 0
        %1356 = vmatpush2.bf16.xpose.msra.mxu0 0
        %1357 = vmatprep.subr.bf16.mxu0 0
        %1358 = vmatpush2.bf16.xpose.msra.mxu0 0
        %1359 = vmatprep.subr.bf16.mxu0 0
        %1360 = vmatpush2.bf16.xpose.msra.mxu0 0
        %1361 = vmatprep.mubr.bf16.mxu0 0
        %1362 = vmatmul.mubr.bf16.gmra.mxu0 %v1281
        %v1363 = vpop.f32.mrf.mxu0
        %v1364 = vadd.f32 0.0, %v1363
        %v1365 = vpop.f32.mrf.mxu0
        %v1366 = vpop.f32.mrf.mxu0
        %v1367 = vadd.f32 0.0, %v1366
        %v1368 = vpop.f32.mrf.mxu0
        %1369 = vmatprep.mubr.bf16.mxu0 0
        %1370 = vmatmul.mubr.bf16.gmra.mxu0 %v1283
        %v1371 = vpop.f32.mrf.mxu0
        %v1372 = vadd.f32 0.0, %v1371
        %v1373 = vpop.f32.mrf.mxu0
        %v1374 = vpop.f32.mrf.mxu0
        %v1375 = vadd.f32 0.0, %v1374
        %v1376 = vpop.f32.mrf.mxu0
        %1377 = vmatprep.mubr.bf16.mxu0 0
        %1378 = vmatmul.mubr.bf16.gmra.mxu0 %v1285
        %v1379 = vpop.f32.mrf.mxu0
        %v1380 = vadd.f32 0.0, %v1379
        %v1381 = vpop.f32.mrf.mxu0
        %v1382 = vpop.f32.mrf.mxu0
        %v1383 = vadd.f32 0.0, %v1382
        %v1384 = vpop.f32.mrf.mxu0
        %1385 = vmatprep.mubr.bf16.mxu0 0
        %1386 = vmatmul.mubr.bf16.gmra.mxu0 %v1287
        %v1387 = vpop.f32.mrf.mxu0
        %v1388 = vadd.f32 0.0, %v1387
        %v1389 = vpop.f32.mrf.mxu0
        %v1390 = vpop.f32.mrf.mxu0
        %v1391 = vadd.f32 0.0, %v1390
        %v1392 = vpop.f32.mrf.mxu0
        %1393 = vmatprep.mubr.bf16.mxu0 0
        %1394 = vmatmul.mubr.bf16.gmra.mxu0 %v1289
        %v1395 = vpop.f32.mrf.mxu0
        %v1396 = vadd.f32 0.0, %v1395
        %v1397 = vpop.f32.mrf.mxu0
        %v1398 = vpop.f32.mrf.mxu0
        %v1399 = vadd.f32 0.0, %v1398
        %v1400 = vpop.f32.mrf.mxu0
        %1401 = vmatprep.mubr.bf16.mxu0 0
        %1402 = vmatmul.mubr.bf16.gmra.mxu0 %v1291
        %v1403 = vpop.f32.mrf.mxu0
        %v1404 = vadd.f32 0.0, %v1403
        %v1405 = vpop.f32.mrf.mxu0
        %v1406 = vpop.f32.mrf.mxu0
        %v1407 = vadd.f32 0.0, %v1406
        %v1408 = vpop.f32.mrf.mxu0
        %1409 = vmatprep.mubr.bf16.mxu0 0
        %1410 = vmatmul.mubr.bf16.gmra.mxu0 %v1293
        %v1411 = vpop.f32.mrf.mxu0
        %v1412 = vadd.f32 0.0, %v1411
        %v1413 = vpop.f32.mrf.mxu0
        %v1414 = vpop.f32.mrf.mxu0
        %v1415 = vadd.f32 0.0, %v1414
        %v1416 = vpop.f32.mrf.mxu0
        %1417 = vmatprep.mubr.bf16.mxu0 0
        %1418 = vmatmul.mubr.bf16.gmra.mxu0 %v1295
        %v1419 = vpop.f32.mrf.mxu0
        %v1420 = vadd.f32 0.0, %v1419
        %v1421 = vpop.f32.mrf.mxu0
        %v1422 = vpop.f32.mrf.mxu0
        %v1423 = vadd.f32 0.0, %v1422
        %v1424 = vpop.f32.mrf.mxu0
        %1425 = vdwg.mxu0
        %v1426 = vmul.f32 %v1364, 0.70710677
        %v1427 = vmul.f32 %v1367, 0.70710677
        %v1428 = vmul.f32 %v1372, 0.70710677
        %v1429 = vmul.f32 %v1375, 0.70710677
        %v1430 = vmul.f32 %v1380, 0.70710677
        %v1431 = vmul.f32 %v1383, 0.70710677
        %v1432 = vmul.f32 %v1388, 0.70710677
        %v1433 = vmul.f32 %v1391, 0.70710677
        %v1434 = vmul.f32 %v1396, 0.70710677
        %v1435 = vmul.f32 %v1399, 0.70710677
        %v1436 = vmul.f32 %v1404, 0.70710677
        %v1437 = vmul.f32 %v1407, 0.70710677
        %v1438 = vmul.f32 %v1412, 0.70710677
        %v1439 = vmul.f32 %v1415, 0.70710677
        %v1440 = vmul.f32 %v1420, 0.70710677
        %v1441 = vmul.f32 %v1423, 0.70710677
        %1442 = vmax.xlane.f32.xlu0 %v1426
        %v1443 = vpop.xlane.xlu0 %1442
        %1444 = vmax.xlane.f32.xlu0 %v1427
        %v1445 = vpop.xlane.xlu0 %1444
        %1446 = vmax.xlane.f32.xlu0 %v1428
        %v1447 = vpop.xlane.xlu0 %1446
        %1448 = vmax.xlane.f32.xlu0 %v1429
        %v1449 = vpop.xlane.xlu0 %1448
        %1450 = vmax.xlane.f32.xlu0 %v1430
        %v1451 = vpop.xlane.xlu0 %1450
        %1452 = vmax.xlane.f32.xlu0 %v1431
        %v1453 = vpop.xlane.xlu0 %1452
        %1454 = vmax.xlane.f32.xlu0 %v1432
        %v1455 = vpop.xlane.xlu0 %1454
        %1456 = vmax.xlane.f32.xlu0 %v1433
        %v1457 = vpop.xlane.xlu0 %1456
        %1458 = vmax.xlane.f32.xlu0 %v1434
        %v1459 = vpop.xlane.xlu0 %1458
        %1460 = vmax.xlane.f32.xlu0 %v1435
        %v1461 = vpop.xlane.xlu0 %1460
        %1462 = vmax.xlane.f32.xlu0 %v1436
        %v1463 = vpop.xlane.xlu0 %1462
        %1464 = vmax.xlane.f32.xlu0 %v1437
        %v1465 = vpop.xlane.xlu0 %1464
        %1466 = vmax.xlane.f32.xlu0 %v1438
        %v1467 = vpop.xlane.xlu0 %1466
        %1468 = vmax.xlane.f32.xlu0 %v1439
        %v1469 = vpop.xlane.xlu0 %1468
        %1470 = vmax.xlane.f32.xlu0 %v1440
        %v1471 = vpop.xlane.xlu0 %1470
        %1472 = vmax.xlane.f32.xlu0 %v1441
        %v1473 = vpop.xlane.xlu0 %1472
        %v1474 = vsub.f32 %v1426, %v1443
        %v1475 = vsub.f32 %v1427, %v1445
        %v1476 = vsub.f32 %v1428, %v1447
        %v1477 = vsub.f32 %v1429, %v1449
        %v1478 = vsub.f32 %v1430, %v1451
        %v1479 = vsub.f32 %v1431, %v1453
        %v1480 = vsub.f32 %v1432, %v1455
        %v1481 = vsub.f32 %v1433, %v1457
        %v1482 = vsub.f32 %v1434, %v1459
        %v1483 = vsub.f32 %v1435, %v1461
        %v1484 = vsub.f32 %v1436, %v1463
        %v1485 = vsub.f32 %v1437, %v1465
        %v1486 = vsub.f32 %v1438, %v1467
        %v1487 = vsub.f32 %v1439, %v1469
        %v1488 = vsub.f32 %v1440, %v1471
        %v1489 = vsub.f32 %v1441, %v1473
        %v1490 = vmul.f32 %v1474, 1.442695
        %v1491 = vpow.pop %v1490
        %v1492 = vmul.f32 %v1475, 1.442695
        %v1493 = vpow.pop %v1492
        %v1494 = vmul.f32 %v1476, 1.442695
        %v1495 = vpow.pop %v1494
        %v1496 = vmul.f32 %v1477, 1.442695
        %v1497 = vpow.pop %v1496
        %v1498 = vmul.f32 %v1478, 1.442695
        %v1499 = vpow.pop %v1498
        %v1500 = vmul.f32 %v1479, 1.442695
        %v1501 = vpow.pop %v1500
        %v1502 = vmul.f32 %v1480, 1.442695
        %v1503 = vpow.pop %v1502
        %v1504 = vmul.f32 %v1481, 1.442695
        %v1505 = vpow.pop %v1504
        %v1506 = vmul.f32 %v1482, 1.442695
        %v1507 = vpow.pop %v1506
        %v1508 = vmul.f32 %v1483, 1.442695
        %v1509 = vpow.pop %v1508
        %v1510 = vmul.f32 %v1484, 1.442695
        %v1511 = vpow.pop %v1510
        %v1512 = vmul.f32 %v1485, 1.442695
        %v1513 = vpow.pop %v1512
        %v1514 = vmul.f32 %v1486, 1.442695
        %v1515 = vpow.pop %v1514
        %v1516 = vmul.f32 %v1487, 1.442695
        %v1517 = vpow.pop %v1516
        %v1518 = vmul.f32 %v1488, 1.442695
        %v1519 = vpow.pop %v1518
        %v1520 = vmul.f32 %v1489, 1.442695
        %v1521 = vpow.pop %v1520
        %1522 = vadd.xlane.f32.xlu0 %v1491
        %v1523 = vpop.xlane.xlu0 %1522
        %1524 = vadd.xlane.f32.xlu0 %v1493
        %v1525 = vpop.xlane.xlu0 %1524
        %1526 = vadd.xlane.f32.xlu0 %v1495
        %v1527 = vpop.xlane.xlu0 %1526
        %1528 = vadd.xlane.f32.xlu0 %v1497
        %v1529 = vpop.xlane.xlu0 %1528
        %1530 = vadd.xlane.f32.xlu0 %v1499
        %v1531 = vpop.xlane.xlu0 %1530
        %1532 = vadd.xlane.f32.xlu0 %v1501
        %v1533 = vpop.xlane.xlu0 %1532
        %1534 = vadd.xlane.f32.xlu0 %v1503
        %v1535 = vpop.xlane.xlu0 %1534
        %1536 = vadd.xlane.f32.xlu0 %v1505
        %v1537 = vpop.xlane.xlu0 %1536
        %1538 = vadd.xlane.f32.xlu0 %v1507
        %v1539 = vpop.xlane.xlu0 %1538
        %1540 = vadd.xlane.f32.xlu0 %v1509
        %v1541 = vpop.xlane.xlu0 %1540
        %1542 = vadd.xlane.f32.xlu0 %v1511
        %v1543 = vpop.xlane.xlu0 %1542
        %1544 = vadd.xlane.f32.xlu0 %v1513
        %v1545 = vpop.xlane.xlu0 %1544
        %1546 = vadd.xlane.f32.xlu0 %v1515
        %v1547 = vpop.xlane.xlu0 %1546
        %1548 = vadd.xlane.f32.xlu0 %v1517
        %v1549 = vpop.xlane.xlu0 %1548
        %1550 = vadd.xlane.f32.xlu0 %v1519
        %v1551 = vpop.xlane.xlu0 %1550
        %1552 = vadd.xlane.f32.xlu0 %v1521
        %v1553 = vpop.xlane.xlu0 %1552
        %v1554 = vrcp.pop %v1523
        %v1555 = vrcp.pop %v1525
        %v1556 = vrcp.pop %v1527
        %v1557 = vrcp.pop %v1529
        %v1558 = vrcp.pop %v1531
        %v1559 = vrcp.pop %v1533
        %v1560 = vrcp.pop %v1535
        %v1561 = vrcp.pop %v1537
        %v1562 = vrcp.pop %v1539
        %v1563 = vrcp.pop %v1541
        %v1564 = vrcp.pop %v1543
        %v1565 = vrcp.pop %v1545
        %v1566 = vrcp.pop %v1547
        %v1567 = vrcp.pop %v1549
        %v1568 = vrcp.pop %v1551
        %v1569 = vrcp.pop %v1553
        %v1570 = vmul.f32 %v1491, %v1554
        %v1571 = vmul.f32 %v1493, %v1555
        %v1572 = vmul.f32 %v1495, %v1556
        %v1573 = vmul.f32 %v1497, %v1557
        %v1574 = vmul.f32 %v1499, %v1558
        %v1575 = vmul.f32 %v1501, %v1559
        %v1576 = vmul.f32 %v1503, %v1560
        %v1577 = vmul.f32 %v1505, %v1561
        %v1578 = vmul.f32 %v1507, %v1562
        %v1579 = vmul.f32 %v1509, %v1563
        %v1580 = vmul.f32 %v1511, %v1564
        %v1581 = vmul.f32 %v1513, %v1565
        %v1582 = vmul.f32 %v1515, %v1566
        %v1583 = vmul.f32 %v1517, %v1567
        %v1584 = vmul.f32 %v1519, %v1568
        %v1585 = vmul.f32 %v1521, %v1569
        %v1586 = vpack.c.bf16 %v1571, %v1570
        %v1587 = vpack.c.bf16 %v1573, %v1572
        %v1588 = vpack.c.bf16 %v1575, %v1574
        %v1589 = vpack.c.bf16 %v1577, %v1576
        %v1590 = vpack.c.bf16 %v1579, %v1578
        %v1591 = vpack.c.bf16 %v1581, %v1580
        %v1592 = vpack.c.bf16 %v1583, %v1582
        %v1593 = vpack.c.bf16 %v1585, %v1584
        %1594 = vmatprep.subr.bf16.mxu0 0
        %1595 = vmatpush1.bf16.msra.mxu0 %v1327
        %1596 = vmatprep.subr.bf16.mxu0 0
        %1597 = vmatpush1.bf16.msra.mxu0 %v1325
        %1598 = vmatprep.subr.bf16.mxu0 0
        %1599 = vmatpush1.bf16.msra.mxu0 %v1323
        %1600 = vmatprep.subr.bf16.mxu0 0
        %1601 = vmatpush1.bf16.msra.mxu0 %v1321
        %1602 = vmatprep.subr.bf16.mxu0 0
        %1603 = vmatpush1.bf16.msra.mxu0 %v1319
        %1604 = vmatprep.subr.bf16.mxu0 0
        %1605 = vmatpush1.bf16.msra.mxu0 %v1317
        %1606 = vmatprep.subr.bf16.mxu0 0
        %1607 = vmatpush1.bf16.msra.mxu0 %v1315
        %1608 = vmatprep.subr.bf16.mxu0 0
        %1609 = vmatpush1.bf16.msra.mxu0 %v1313
        %1610 = vmatprep.subr.bf16.mxu0 0
        %1611 = vmatpush2.bf16.msra.mxu0 0
        %1612 = vmatprep.subr.bf16.mxu0 0
        %1613 = vmatpush2.bf16.msra.mxu0 0
        %1614 = vmatprep.subr.bf16.mxu0 0
        %1615 = vmatpush2.bf16.msra.mxu0 0
        %1616 = vmatprep.subr.bf16.mxu0 0
        %1617 = vmatpush2.bf16.msra.mxu0 0
        %1618 = vmatprep.subr.bf16.mxu0 0
        %1619 = vmatpush2.bf16.msra.mxu0 0
        %1620 = vmatprep.subr.bf16.mxu0 0
        %1621 = vmatpush2.bf16.msra.mxu0 0
        %1622 = vmatprep.subr.bf16.mxu0 0
        %1623 = vmatpush2.bf16.msra.mxu0 0
        %1624 = vmatprep.subr.bf16.mxu0 0
        %1625 = vmatpush2.bf16.msra.mxu0 0
        %1626 = vmatprep.mubr.bf16.mxu0 0
        %1627 = vmatmul.mubr.bf16.gmra.mxu0 %v1586
        %v1628 = vpop.f32.mrf.mxu0
        %v1629 = vadd.f32 0.0, %v1628
        %v1630 = vpop.f32.mrf.mxu0
        %v1631 = vpop.f32.mrf.mxu0
        %v1632 = vadd.f32 0.0, %v1631
        %v1633 = vpop.f32.mrf.mxu0
        %1634 = vmatprep.mubr.bf16.mxu0 0
        %1635 = vmatmul.mubr.bf16.gmra.mxu0 %v1587
        %v1636 = vpop.f32.mrf.mxu0
        %v1637 = vadd.f32 0.0, %v1636
        %v1638 = vpop.f32.mrf.mxu0
        %v1639 = vpop.f32.mrf.mxu0
        %v1640 = vadd.f32 0.0, %v1639
        %v1641 = vpop.f32.mrf.mxu0
        %1642 = vmatprep.mubr.bf16.mxu0 0
        %1643 = vmatmul.mubr.bf16.gmra.mxu0 %v1588
        %v1644 = vpop.f32.mrf.mxu0
        %v1645 = vadd.f32 0.0, %v1644
        %v1646 = vpop.f32.mrf.mxu0
        %v1647 = vpop.f32.mrf.mxu0
        %v1648 = vadd.f32 0.0, %v1647
        %v1649 = vpop.f32.mrf.mxu0
        %1650 = vmatprep.mubr.bf16.mxu0 0
        %1651 = vmatmul.mubr.bf16.gmra.mxu0 %v1589
        %v1652 = vpop.f32.mrf.mxu0
        %v1653 = vadd.f32 0.0, %v1652
        %v1654 = vpop.f32.mrf.mxu0
        %v1655 = vpop.f32.mrf.mxu0
        %v1656 = vadd.f32 0.0, %v1655
        %v1657 = vpop.f32.mrf.mxu0
        %1658 = vmatprep.mubr.bf16.mxu0 0
        %1659 = vmatmul.mubr.bf16.gmra.mxu0 %v1590
        %v1660 = vpop.f32.mrf.mxu0
        %v1661 = vadd.f32 0.0, %v1660
        %v1662 = vpop.f32.mrf.mxu0
        %v1663 = vpop.f32.mrf.mxu0
        %v1664 = vadd.f32 0.0, %v1663
        %v1665 = vpop.f32.mrf.mxu0
        %1666 = vmatprep.mubr.bf16.mxu0 0
        %1667 = vmatmul.mubr.bf16.gmra.mxu0 %v1591
        %v1668 = vpop.f32.mrf.mxu0
        %v1669 = vadd.f32 0.0, %v1668
        %v1670 = vpop.f32.mrf.mxu0
        %v1671 = vpop.f32.mrf.mxu0
        %v1672 = vadd.f32 0.0, %v1671
        %v1673 = vpop.f32.mrf.mxu0
        %1674 = vmatprep.mubr.bf16.mxu0 0
        %1675 = vmatmul.mubr.bf16.gmra.mxu0 %v1592
        %v1676 = vpop.f32.mrf.mxu0
        %v1677 = vadd.f32 0.0, %v1676
        %v1678 = vpop.f32.mrf.mxu0
        %v1679 = vpop.f32.mrf.mxu0
        %v1680 = vadd.f32 0.0, %v1679
        %v1681 = vpop.f32.mrf.mxu0
        %1682 = vmatprep.mubr.bf16.mxu0 0
        %1683 = vmatmul.mubr.bf16.gmra.mxu0 %v1593
        %v1684 = vpop.f32.mrf.mxu0
        %v1685 = vadd.f32 0.0, %v1684
        %v1686 = vpop.f32.mrf.mxu0
        %v1687 = vpop.f32.mrf.mxu0
        %v1688 = vadd.f32 0.0, %v1687
        %v1689 = vpop.f32.mrf.mxu0
        %1690 = vdwg.mxu0
        %v1691 = vpack.c.bf16 %v1632, %v1629
        %v1692 = vpack.c.bf16 %v1640, %v1637
        %v1693 = vpack.c.bf16 %v1648, %v1645
        %v1694 = vpack.c.bf16 %v1656, %v1653
        %v1695 = vpack.c.bf16 %v1664, %v1661
        %v1696 = vpack.c.bf16 %v1672, %v1669
        %v1697 = vpack.c.bf16 %v1680, %v1677
        %v1698 = vpack.c.bf16 %v1688, %v1685
        %v1707 = vunpack.c.l.b16 %v1691
        %v1708 = vunpack.c.h.b16 %v1691
        %v1709 = vunpack.c.l.b16 %v1692
        %v1710 = vunpack.c.h.b16 %v1692
        %v1711 = vunpack.c.l.b16 %v1693
        %v1712 = vunpack.c.h.b16 %v1693
        %v1713 = vunpack.c.l.b16 %v1694
        %v1714 = vunpack.c.h.b16 %v1694
        %v1715 = vunpack.c.l.b16 %v1695
        %v1716 = vunpack.c.h.b16 %v1695
        %v1717 = vunpack.c.l.b16 %v1696
        %v1718 = vunpack.c.h.b16 %v1696
        %v1719 = vunpack.c.l.b16 %v1697
        %v1720 = vunpack.c.h.b16 %v1697
        %v1721 = vunpack.c.l.b16 %v1698
        %v1722 = vunpack.c.h.b16 %v1698
        %v1723 = vpack.c.b16 %v1707, %v1707
        %v1724 = vpack.c.b16 %v1708, %v1708
        %v1725 = vpack.c.b16 %v1709, %v1709
        %v1726 = vpack.c.b16 %v1710, %v1710
        %v1727 = vpack.c.b16 %v1711, %v1711
        %v1728 = vpack.c.b16 %v1712, %v1712
        %v1729 = vpack.c.b16 %v1713, %v1713
        %v1730 = vpack.c.b16 %v1714, %v1714
        %v1731 = vpack.c.b16 %v1715, %v1715
        %v1732 = vpack.c.b16 %v1716, %v1716
        %v1733 = vpack.c.b16 %v1717, %v1717
        %v1734 = vpack.c.b16 %v1718, %v1718
        %v1735 = vpack.c.b16 %v1719, %v1719
        %v1736 = vpack.c.b16 %v1720, %v1720
        %v1737 = vpack.c.b16 %v1721, %v1721
        %v1738 = vpack.c.b16 %v1722, %v1722
        %1755 = vst [vmem:[#allocation2] sm:$0xf] %v1723
        %1756 = vst [vmem:[#allocation2 + $0x8] sm:$0xf] %v1724
        %1757 = vst [vmem:[#allocation2 + $0x10] sm:$0xf] %v1725
        %1758 = vst [vmem:[#allocation2 + $0x18] sm:$0xf] %v1726
        %1759 = vst [vmem:[#allocation2 + $0x20] sm:$0xf] %v1727
        %1760 = vst [vmem:[#allocation2 + $0x28] sm:$0xf] %v1728
        %1761 = vst [vmem:[#allocation2 + $0x30] sm:$0xf] %v1729
        %1762 = vst [vmem:[#allocation2 + $0x38] sm:$0xf] %v1730
        %1763 = vst [vmem:[#allocation2 + $0x40] sm:$0xf] %v1731
        %1764 = vst [vmem:[#allocation2 + $0x48] sm:$0xf] %v1732
        %1765 = vst [vmem:[#allocation2 + $0x50] sm:$0xf] %v1733
        %1766 = vst [vmem:[#allocation2 + $0x58] sm:$0xf] %v1734
        %1767 = vst [vmem:[#allocation2 + $0x60] sm:$0xf] %v1735
        %1768 = vst [vmem:[#allocation2 + $0x68] sm:$0xf] %v1736
        %1769 = vst [vmem:[#allocation2 + $0x70] sm:$0xf] %v1737
        %1770 = vst [vmem:[#allocation2 + $0x78] sm:$0xf] %v1738
        %1771 = vmatprep.subr.bf16.mxu0 0
        %1772 = vmatpush1.bf16.xpose.msra.mxu0 %v1312
        %1773 = vmatprep.subr.bf16.mxu0 0
        %1774 = vmatpush1.bf16.xpose.msra.mxu0 %v1310
        %1775 = vmatprep.subr.bf16.mxu0 0
        %1776 = vmatpush1.bf16.xpose.msra.mxu0 %v1308
        %1777 = vmatprep.subr.bf16.mxu0 0
        %1778 = vmatpush1.bf16.xpose.msra.mxu0 %v1306
        %1779 = vmatprep.subr.bf16.mxu0 0
        %1780 = vmatpush1.bf16.xpose.msra.mxu0 %v1304
        %1781 = vmatprep.subr.bf16.mxu0 0
        %1782 = vmatpush1.bf16.xpose.msra.mxu0 %v1302
        %1783 = vmatprep.subr.bf16.mxu0 0
        %1784 = vmatpush1.bf16.xpose.msra.mxu0 %v1300
        %1785 = vmatprep.subr.bf16.mxu0 0
        %1786 = vmatpush1.bf16.xpose.msra.mxu0 %v1298
        %1787 = vmatprep.subr.bf16.mxu0 0
        %1788 = vmatpush2.bf16.xpose.msra.mxu0 0
        %1789 = vmatprep.subr.bf16.mxu0 0
        %1790 = vmatpush2.bf16.xpose.msra.mxu0 0
        %1791 = vmatprep.subr.bf16.mxu0 0
        %1792 = vmatpush2.bf16.xpose.msra.mxu0 0
        %1793 = vmatprep.subr.bf16.mxu0 0
        %1794 = vmatpush2.bf16.xpose.msra.mxu0 0
        %1795 = vmatprep.subr.bf16.mxu0 0
        %1796 = vmatpush2.bf16.xpose.msra.mxu0 0
        %1797 = vmatprep.subr.bf16.mxu0 0
        %1798 = vmatpush2.bf16.xpose.msra.mxu0 0
        %1799 = vmatprep.subr.bf16.mxu0 0
        %1800 = vmatpush2.bf16.xpose.msra.mxu0 0
        %1801 = vmatprep.subr.bf16.mxu0 0
        %1802 = vmatpush2.bf16.xpose.msra.mxu0 0
        %1803 = vmatprep.mubr.bf16.mxu0 0
        %1804 = vmatmul.mubr.bf16.gmra.mxu0 %v1282
        %v1805 = vpop.f32.mrf.mxu0
        %v1806 = vadd.f32 0.0, %v1805
        %v1807 = vpop.f32.mrf.mxu0
        %v1808 = vpop.f32.mrf.mxu0
        %v1809 = vadd.f32 0.0, %v1808
        %v1810 = vpop.f32.mrf.mxu0
        %1811 = vmatprep.mubr.bf16.mxu0 0
        %1812 = vmatmul.mubr.bf16.gmra.mxu0 %v1284
        %v1813 = vpop.f32.mrf.mxu0
        %v1814 = vadd.f32 0.0, %v1813
        %v1815 = vpop.f32.mrf.mxu0
        %v1816 = vpop.f32.mrf.mxu0
        %v1817 = vadd.f32 0.0, %v1816
        %v1818 = vpop.f32.mrf.mxu0
        %1819 = vmatprep.mubr.bf16.mxu0 0
        %1820 = vmatmul.mubr.bf16.gmra.mxu0 %v1286
        %v1821 = vpop.f32.mrf.mxu0
        %v1822 = vadd.f32 0.0, %v1821
        %v1823 = vpop.f32.mrf.mxu0
        %v1824 = vpop.f32.mrf.mxu0
        %v1825 = vadd.f32 0.0, %v1824
        %v1826 = vpop.f32.mrf.mxu0
        %1827 = vmatprep.mubr.bf16.mxu0 0
        %1828 = vmatmul.mubr.bf16.gmra.mxu0 %v1288
        %v1829 = vpop.f32.mrf.mxu0
        %v1830 = vadd.f32 0.0, %v1829
        %v1831 = vpop.f32.mrf.mxu0
        %v1832 = vpop.f32.mrf.mxu0
        %v1833 = vadd.f32 0.0, %v1832
        %v1834 = vpop.f32.mrf.mxu0
        %1835 = vmatprep.mubr.bf16.mxu0 0
        %1836 = vmatmul.mubr.bf16.gmra.mxu0 %v1290
        %v1837 = vpop.f32.mrf.mxu0
        %v1838 = vadd.f32 0.0, %v1837
        %v1839 = vpop.f32.mrf.mxu0
        %v1840 = vpop.f32.mrf.mxu0
        %v1841 = vadd.f32 0.0, %v1840
        %v1842 = vpop.f32.mrf.mxu0
        %1843 = vmatprep.mubr.bf16.mxu0 0
        %1844 = vmatmul.mubr.bf16.gmra.mxu0 %v1292
        %v1845 = vpop.f32.mrf.mxu0
        %v1846 = vadd.f32 0.0, %v1845
        %v1847 = vpop.f32.mrf.mxu0
        %v1848 = vpop.f32.mrf.mxu0
        %v1849 = vadd.f32 0.0, %v1848
        %v1850 = vpop.f32.mrf.mxu0
        %1851 = vmatprep.mubr.bf16.mxu0 0
        %1852 = vmatmul.mubr.bf16.gmra.mxu0 %v1294
        %v1853 = vpop.f32.mrf.mxu0
        %v1854 = vadd.f32 0.0, %v1853
        %v1855 = vpop.f32.mrf.mxu0
        %v1856 = vpop.f32.mrf.mxu0
        %v1857 = vadd.f32 0.0, %v1856
        %v1858 = vpop.f32.mrf.mxu0
        %1859 = vmatprep.mubr.bf16.mxu0 0
        %1860 = vmatmul.mubr.bf16.gmra.mxu0 %v1296
        %v1861 = vpop.f32.mrf.mxu0
        %v1862 = vadd.f32 0.0, %v1861
        %v1863 = vpop.f32.mrf.mxu0
        %v1864 = vpop.f32.mrf.mxu0
        %v1865 = vadd.f32 0.0, %v1864
        %v1866 = vpop.f32.mrf.mxu0
        %1867 = vdwg.mxu0
        %v1868 = vmul.f32 %v1806, 0.70710677
        %v1869 = vmul.f32 %v1809, 0.70710677
        %v1870 = vmul.f32 %v1814, 0.70710677
        %v1871 = vmul.f32 %v1817, 0.70710677
        %v1872 = vmul.f32 %v1822, 0.70710677
        %v1873 = vmul.f32 %v1825, 0.70710677
        %v1874 = vmul.f32 %v1830, 0.70710677
        %v1875 = vmul.f32 %v1833, 0.70710677
        %v1876 = vmul.f32 %v1838, 0.70710677
        %v1877 = vmul.f32 %v1841, 0.70710677
        %v1878 = vmul.f32 %v1846, 0.70710677
        %v1879 = vmul.f32 %v1849, 0.70710677
        %v1880 = vmul.f32 %v1854, 0.70710677
        %v1881 = vmul.f32 %v1857, 0.70710677
        %v1882 = vmul.f32 %v1862, 0.70710677
        %v1883 = vmul.f32 %v1865, 0.70710677
        %1884 = vmax.xlane.f32.xlu0 %v1868
        %v1885 = vpop.xlane.xlu0 %1884
        %1886 = vmax.xlane.f32.xlu0 %v1869
        %v1887 = vpop.xlane.xlu0 %1886
        %1888 = vmax.xlane.f32.xlu0 %v1870
        %v1889 = vpop.xlane.xlu0 %1888
        %1890 = vmax.xlane.f32.xlu0 %v1871
        %v1891 = vpop.xlane.xlu0 %1890
        %1892 = vmax.xlane.f32.xlu0 %v1872
        %v1893 = vpop.xlane.xlu0 %1892
        %1894 = vmax.xlane.f32.xlu0 %v1873
        %v1895 = vpop.xlane.xlu0 %1894
        %1896 = vmax.xlane.f32.xlu0 %v1874
        %v1897 = vpop.xlane.xlu0 %1896
        %1898 = vmax.xlane.f32.xlu0 %v1875
        %v1899 = vpop.xlane.xlu0 %1898
        %1900 = vmax.xlane.f32.xlu0 %v1876
        %v1901 = vpop.xlane.xlu0 %1900
        %1902 = vmax.xlane.f32.xlu0 %v1877
        %v1903 = vpop.xlane.xlu0 %1902
        %1904 = vmax.xlane.f32.xlu0 %v1878
        %v1905 = vpop.xlane.xlu0 %1904
        %1906 = vmax.xlane.f32.xlu0 %v1879
        %v1907 = vpop.xlane.xlu0 %1906
        %1908 = vmax.xlane.f32.xlu0 %v1880
        %v1909 = vpop.xlane.xlu0 %1908
        %1910 = vmax.xlane.f32.xlu0 %v1881
        %v1911 = vpop.xlane.xlu0 %1910
        %1912 = vmax.xlane.f32.xlu0 %v1882
        %v1913 = vpop.xlane.xlu0 %1912
        %1914 = vmax.xlane.f32.xlu0 %v1883
        %v1915 = vpop.xlane.xlu0 %1914
        %v1916 = vsub.f32 %v1868, %v1885
        %v1917 = vsub.f32 %v1869, %v1887
        %v1918 = vsub.f32 %v1870, %v1889
        %v1919 = vsub.f32 %v1871, %v1891
        %v1920 = vsub.f32 %v1872, %v1893
        %v1921 = vsub.f32 %v1873, %v1895
        %v1922 = vsub.f32 %v1874, %v1897
        %v1923 = vsub.f32 %v1875, %v1899
        %v1924 = vsub.f32 %v1876, %v1901
        %v1925 = vsub.f32 %v1877, %v1903
        %v1926 = vsub.f32 %v1878, %v1905
        %v1927 = vsub.f32 %v1879, %v1907
        %v1928 = vsub.f32 %v1880, %v1909
        %v1929 = vsub.f32 %v1881, %v1911
        %v1930 = vsub.f32 %v1882, %v1913
        %v1931 = vsub.f32 %v1883, %v1915
        %v1932 = vmul.f32 %v1916, 1.442695
        %v1933 = vpow.pop %v1932
        %v1934 = vmul.f32 %v1917, 1.442695
        %v1935 = vpow.pop %v1934
        %v1936 = vmul.f32 %v1918, 1.442695
        %v1937 = vpow.pop %v1936
        %v1938 = vmul.f32 %v1919, 1.442695
        %v1939 = vpow.pop %v1938
        %v1940 = vmul.f32 %v1920, 1.442695
        %v1941 = vpow.pop %v1940
        %v1942 = vmul.f32 %v1921, 1.442695
        %v1943 = vpow.pop %v1942
        %v1944 = vmul.f32 %v1922, 1.442695
        %v1945 = vpow.pop %v1944
        %v1946 = vmul.f32 %v1923, 1.442695
        %v1947 = vpow.pop %v1946
        %v1948 = vmul.f32 %v1924, 1.442695
        %v1949 = vpow.pop %v1948
        %v1950 = vmul.f32 %v1925, 1.442695
        %v1951 = vpow.pop %v1950
        %v1952 = vmul.f32 %v1926, 1.442695
        %v1953 = vpow.pop %v1952
        %v1954 = vmul.f32 %v1927, 1.442695
        %v1955 = vpow.pop %v1954
        %v1956 = vmul.f32 %v1928, 1.442695
        %v1957 = vpow.pop %v1956
        %v1958 = vmul.f32 %v1929, 1.442695
        %v1959 = vpow.pop %v1958
        %v1960 = vmul.f32 %v1930, 1.442695
        %v1961 = vpow.pop %v1960
        %v1962 = vmul.f32 %v1931, 1.442695
        %v1963 = vpow.pop %v1962
        %1964 = vadd.xlane.f32.xlu0 %v1933
        %v1965 = vpop.xlane.xlu0 %1964
        %1966 = vadd.xlane.f32.xlu0 %v1935
        %v1967 = vpop.xlane.xlu0 %1966
        %1968 = vadd.xlane.f32.xlu0 %v1937
        %v1969 = vpop.xlane.xlu0 %1968
        %1970 = vadd.xlane.f32.xlu0 %v1939
        %v1971 = vpop.xlane.xlu0 %1970
        %1972 = vadd.xlane.f32.xlu0 %v1941
        %v1973 = vpop.xlane.xlu0 %1972
        %1974 = vadd.xlane.f32.xlu0 %v1943
        %v1975 = vpop.xlane.xlu0 %1974
        %1976 = vadd.xlane.f32.xlu0 %v1945
        %v1977 = vpop.xlane.xlu0 %1976
        %1978 = vadd.xlane.f32.xlu0 %v1947
        %v1979 = vpop.xlane.xlu0 %1978
        %1980 = vadd.xlane.f32.xlu0 %v1949
        %v1981 = vpop.xlane.xlu0 %1980
        %1982 = vadd.xlane.f32.xlu0 %v1951
        %v1983 = vpop.xlane.xlu0 %1982
        %1984 = vadd.xlane.f32.xlu0 %v1953
        %v1985 = vpop.xlane.xlu0 %1984
        %1986 = vadd.xlane.f32.xlu0 %v1955
        %v1987 = vpop.xlane.xlu0 %1986
        %1988 = vadd.xlane.f32.xlu0 %v1957
        %v1989 = vpop.xlane.xlu0 %1988
        %1990 = vadd.xlane.f32.xlu0 %v1959
        %v1991 = vpop.xlane.xlu0 %1990
        %1992 = vadd.xlane.f32.xlu0 %v1961
        %v1993 = vpop.xlane.xlu0 %1992
        %1994 = vadd.xlane.f32.xlu0 %v1963
        %v1995 = vpop.xlane.xlu0 %1994
        %v1996 = vrcp.pop %v1965
        %v1997 = vrcp.pop %v1967
        %v1998 = vrcp.pop %v1969
        %v1999 = vrcp.pop %v1971
        %v2000 = vrcp.pop %v1973
        %v2001 = vrcp.pop %v1975
        %v2002 = vrcp.pop %v1977
        %v2003 = vrcp.pop %v1979
        %v2004 = vrcp.pop %v1981
        %v2005 = vrcp.pop %v1983
        %v2006 = vrcp.pop %v1985
        %v2007 = vrcp.pop %v1987
        %v2008 = vrcp.pop %v1989
        %v2009 = vrcp.pop %v1991
        %v2010 = vrcp.pop %v1993
        %v2011 = vrcp.pop %v1995
        %v2012 = vmul.f32 %v1933, %v1996
        %v2013 = vmul.f32 %v1935, %v1997
        %v2014 = vmul.f32 %v1937, %v1998
        %v2015 = vmul.f32 %v1939, %v1999
        %v2016 = vmul.f32 %v1941, %v2000
        %v2017 = vmul.f32 %v1943, %v2001
        %v2018 = vmul.f32 %v1945, %v2002
        %v2019 = vmul.f32 %v1947, %v2003
        %v2020 = vmul.f32 %v1949, %v2004
        %v2021 = vmul.f32 %v1951, %v2005
        %v2022 = vmul.f32 %v1953, %v2006
        %v2023 = vmul.f32 %v1955, %v2007
        %v2024 = vmul.f32 %v1957, %v2008
        %v2025 = vmul.f32 %v1959, %v2009
        %v2026 = vmul.f32 %v1961, %v2010
        %v2027 = vmul.f32 %v1963, %v2011
        %v2028 = vpack.c.bf16 %v2013, %v2012
        %v2029 = vpack.c.bf16 %v2015, %v2014
        %v2030 = vpack.c.bf16 %v2017, %v2016
        %v2031 = vpack.c.bf16 %v2019, %v2018
        %v2032 = vpack.c.bf16 %v2021, %v2020
        %v2033 = vpack.c.bf16 %v2023, %v2022
        %v2034 = vpack.c.bf16 %v2025, %v2024
        %v2035 = vpack.c.bf16 %v2027, %v2026
        %2036 = vmatprep.subr.bf16.mxu0 0
        %2037 = vmatpush1.bf16.msra.mxu0 %v1328
        %2038 = vmatprep.subr.bf16.mxu0 0
        %2039 = vmatpush1.bf16.msra.mxu0 %v1326
        %2040 = vmatprep.subr.bf16.mxu0 0
        %2041 = vmatpush1.bf16.msra.mxu0 %v1324
        %2042 = vmatprep.subr.bf16.mxu0 0
        %2043 = vmatpush1.bf16.msra.mxu0 %v1322
        %2044 = vmatprep.subr.bf16.mxu0 0
        %2045 = vmatpush1.bf16.msra.mxu0 %v1320
        %2046 = vmatprep.subr.bf16.mxu0 0
        %2047 = vmatpush1.bf16.msra.mxu0 %v1318
        %2048 = vmatprep.subr.bf16.mxu0 0
        %2049 = vmatpush1.bf16.msra.mxu0 %v1316
        %2050 = vmatprep.subr.bf16.mxu0 0
        %2051 = vmatpush1.bf16.msra.mxu0 %v1314
        %2052 = vmatprep.subr.bf16.mxu0 0
        %2053 = vmatpush2.bf16.msra.mxu0 0
        %2054 = vmatprep.subr.bf16.mxu0 0
        %2055 = vmatpush2.bf16.msra.mxu0 0
        %2056 = vmatprep.subr.bf16.mxu0 0
        %2057 = vmatpush2.bf16.msra.mxu0 0
        %2058 = vmatprep.subr.bf16.mxu0 0
        %2059 = vmatpush2.bf16.msra.mxu0 0
        %2060 = vmatprep.subr.bf16.mxu0 0
        %2061 = vmatpush2.bf16.msra.mxu0 0
        %2062 = vmatprep.subr.bf16.mxu0 0
        %2063 = vmatpush2.bf16.msra.mxu0 0
        %2064 = vmatprep.subr.bf16.mxu0 0
        %2065 = vmatpush2.bf16.msra.mxu0 0
        %2066 = vmatprep.subr.bf16.mxu0 0
        %2067 = vmatpush2.bf16.msra.mxu0 0
        %2068 = vmatprep.mubr.bf16.mxu0 0
        %2069 = vmatmul.mubr.bf16.gmra.mxu0 %v2028
        %v2070 = vpop.f32.mrf.mxu0
        %v2071 = vadd.f32 0.0, %v2070
        %v2072 = vpop.f32.mrf.mxu0
        %v2073 = vpop.f32.mrf.mxu0
        %v2074 = vadd.f32 0.0, %v2073
        %v2075 = vpop.f32.mrf.mxu0
        %2076 = vmatprep.mubr.bf16.mxu0 0
        %2077 = vmatmul.mubr.bf16.gmra.mxu0 %v2029
        %v2078 = vpop.f32.mrf.mxu0
        %v2079 = vadd.f32 0.0, %v2078
        %v2080 = vpop.f32.mrf.mxu0
        %v2081 = vpop.f32.mrf.mxu0
        %v2082 = vadd.f32 0.0, %v2081
        %v2083 = vpop.f32.mrf.mxu0
        %2084 = vmatprep.mubr.bf16.mxu0 0
        %2085 = vmatmul.mubr.bf16.gmra.mxu0 %v2030
        %v2086 = vpop.f32.mrf.mxu0
        %v2087 = vadd.f32 0.0, %v2086
        %v2088 = vpop.f32.mrf.mxu0
        %v2089 = vpop.f32.mrf.mxu0
        %v2090 = vadd.f32 0.0, %v2089
        %v2091 = vpop.f32.mrf.mxu0
        %2092 = vmatprep.mubr.bf16.mxu0 0
        %2093 = vmatmul.mubr.bf16.gmra.mxu0 %v2031
        %v2094 = vpop.f32.mrf.mxu0
        %v2095 = vadd.f32 0.0, %v2094
        %v2096 = vpop.f32.mrf.mxu0
        %v2097 = vpop.f32.mrf.mxu0
        %v2098 = vadd.f32 0.0, %v2097
        %v2099 = vpop.f32.mrf.mxu0
        %2100 = vmatprep.mubr.bf16.mxu0 0
        %2101 = vmatmul.mubr.bf16.gmra.mxu0 %v2032
        %v2102 = vpop.f32.mrf.mxu0
        %v2103 = vadd.f32 0.0, %v2102
        %v2104 = vpop.f32.mrf.mxu0
        %v2105 = vpop.f32.mrf.mxu0
        %v2106 = vadd.f32 0.0, %v2105
        %v2107 = vpop.f32.mrf.mxu0
        %2108 = vmatprep.mubr.bf16.mxu0 0
        %2109 = vmatmul.mubr.bf16.gmra.mxu0 %v2033
        %v2110 = vpop.f32.mrf.mxu0
        %v2111 = vadd.f32 0.0, %v2110
        %v2112 = vpop.f32.mrf.mxu0
        %v2113 = vpop.f32.mrf.mxu0
        %v2114 = vadd.f32 0.0, %v2113
        %v2115 = vpop.f32.mrf.mxu0
        %2116 = vmatprep.mubr.bf16.mxu0 0
        %2117 = vmatmul.mubr.bf16.gmra.mxu0 %v2034
        %v2118 = vpop.f32.mrf.mxu0
        %v2119 = vadd.f32 0.0, %v2118
        %v2120 = vpop.f32.mrf.mxu0
        %v2121 = vpop.f32.mrf.mxu0
        %v2122 = vadd.f32 0.0, %v2121
        %v2123 = vpop.f32.mrf.mxu0
        %2124 = vmatprep.mubr.bf16.mxu0 0
        %2125 = vmatmul.mubr.bf16.gmra.mxu0 %v2035
        %v2126 = vpop.f32.mrf.mxu0
        %v2127 = vadd.f32 0.0, %v2126
        %v2128 = vpop.f32.mrf.mxu0
        %v2129 = vpop.f32.mrf.mxu0
        %v2130 = vadd.f32 0.0, %v2129
        %v2131 = vpop.f32.mrf.mxu0
        %2132 = vdwg.mxu0
        %v2133 = vpack.c.bf16 %v2074, %v2071
        %v2134 = vpack.c.bf16 %v2082, %v2079
        %v2135 = vpack.c.bf16 %v2090, %v2087
        %v2136 = vpack.c.bf16 %v2098, %v2095
        %v2137 = vpack.c.bf16 %v2106, %v2103
        %v2138 = vpack.c.bf16 %v2114, %v2111
        %v2139 = vpack.c.bf16 %v2122, %v2119
        %v2140 = vpack.c.bf16 %v2130, %v2127
        %v2149 = vunpack.c.l.b16 %v2133
        %v2150 = vunpack.c.h.b16 %v2133
        %v2151 = vunpack.c.l.b16 %v2134
        %v2152 = vunpack.c.h.b16 %v2134
        %v2153 = vunpack.c.l.b16 %v2135
        %v2154 = vunpack.c.h.b16 %v2135
        %v2155 = vunpack.c.l.b16 %v2136
        %v2156 = vunpack.c.h.b16 %v2136
        %v2157 = vunpack.c.l.b16 %v2137
        %v2158 = vunpack.c.h.b16 %v2137
        %v2159 = vunpack.c.l.b16 %v2138
        %v2160 = vunpack.c.h.b16 %v2138
        %v2161 = vunpack.c.l.b16 %v2139
        %v2162 = vunpack.c.h.b16 %v2139
        %v2163 = vunpack.c.l.b16 %v2140
        %v2164 = vunpack.c.h.b16 %v2140
        %v2165 = vpack.c.b16 %v2149, %v2149
        %v2166 = vpack.c.b16 %v2150, %v2150
        %v2167 = vpack.c.b16 %v2151, %v2151
        %v2168 = vpack.c.b16 %v2152, %v2152
        %v2169 = vpack.c.b16 %v2153, %v2153
        %v2170 = vpack.c.b16 %v2154, %v2154
        %v2171 = vpack.c.b16 %v2155, %v2155
        %v2172 = vpack.c.b16 %v2156, %v2156
        %v2173 = vpack.c.b16 %v2157, %v2157
        %v2174 = vpack.c.b16 %v2158, %v2158
        %v2175 = vpack.c.b16 %v2159, %v2159
        %v2176 = vpack.c.b16 %v2160, %v2160
        %v2177 = vpack.c.b16 %v2161, %v2161
        %v2178 = vpack.c.b16 %v2162, %v2162
        %v2179 = vpack.c.b16 %v2163, %v2163
        %v2180 = vpack.c.b16 %v2164, %v2164
        %2197 = vst [vmem:[#allocation2 + $0x4] sm:$0xf] %v2165
        %2198 = vst [vmem:[#allocation2 + $0xc] sm:$0xf] %v2166
        %2199 = vst [vmem:[#allocation2 + $0x14] sm:$0xf] %v2167
        %2200 = vst [vmem:[#allocation2 + $0x1c] sm:$0xf] %v2168
        %2201 = vst [vmem:[#allocation2 + $0x24] sm:$0xf] %v2169
        %2202 = vst [vmem:[#allocation2 + $0x2c] sm:$0xf] %v2170
        %2203 = vst [vmem:[#allocation2 + $0x34] sm:$0xf] %v2171
        %2204 = vst [vmem:[#allocation2 + $0x3c] sm:$0xf] %v2172
        %2205 = vst [vmem:[#allocation2 + $0x44] sm:$0xf] %v2173
        %2206 = vst [vmem:[#allocation2 + $0x4c] sm:$0xf] %v2174
        %2207 = vst [vmem:[#allocation2 + $0x54] sm:$0xf] %v2175
        %2208 = vst [vmem:[#allocation2 + $0x5c] sm:$0xf] %v2176
        %2209 = vst [vmem:[#allocation2 + $0x64] sm:$0xf] %v2177
        %2210 = vst [vmem:[#allocation2 + $0x6c] sm:$0xf] %v2178
        %2211 = vst [vmem:[#allocation2 + $0x74] sm:$0xf] %v2179
        %2212 = vst [vmem:[#allocation2 + $0x7c] sm:$0xf] %v2180
        %v2213 = vld [vmem:[#allocation2] sm:$0xff]
        %v2214 = vld [vmem:[#allocation2 + $0x8] sm:$0xff]
        %v2215 = vld [vmem:[#allocation2 + $0x10] sm:$0xff]
        %v2216 = vld [vmem:[#allocation2 + $0x18] sm:$0xff]
        %v2217 = vld [vmem:[#allocation2 + $0x20] sm:$0xff]
        %v2218 = vld [vmem:[#allocation2 + $0x28] sm:$0xff]
        %v2219 = vld [vmem:[#allocation2 + $0x30] sm:$0xff]
        %v2220 = vld [vmem:[#allocation2 + $0x38] sm:$0xff]
        %v2221 = vld [vmem:[#allocation2 + $0x40] sm:$0xff]
        %v2222 = vld [vmem:[#allocation2 + $0x48] sm:$0xff]
        %v2223 = vld [vmem:[#allocation2 + $0x50] sm:$0xff]
        %v2224 = vld [vmem:[#allocation2 + $0x58] sm:$0xff]
        %v2225 = vld [vmem:[#allocation2 + $0x60] sm:$0xff]
        %v2226 = vld [vmem:[#allocation2 + $0x68] sm:$0xff]
        %v2227 = vld [vmem:[#allocation2 + $0x70] sm:$0xff]
        %v2228 = vld [vmem:[#allocation2 + $0x78] sm:$0xff]
        %v2229 = vld [vmem:[#allocation9] sm:$0xff]
        %v2230 = vld [vmem:[#allocation9 + $0x8] sm:$0xff]
        %v2231 = vld [vmem:[#allocation9 + $0x10] sm:$0xff]
        %v2232 = vld [vmem:[#allocation9 + $0x18] sm:$0xff]
        %v2233 = vld [vmem:[#allocation9 + $0x20] sm:$0xff]
        %v2234 = vld [vmem:[#allocation9 + $0x28] sm:$0xff]
        %v2235 = vld [vmem:[#allocation9 + $0x30] sm:$0xff]
        %v2236 = vld [vmem:[#allocation9 + $0x38] sm:$0xff]
        %v2237 = vld [vmem:[#allocation9 + $0x40] sm:$0xff]
        %v2238 = vld [vmem:[#allocation9 + $0x48] sm:$0xff]
        %v2239 = vld [vmem:[#allocation9 + $0x50] sm:$0xff]
        %v2240 = vld [vmem:[#allocation9 + $0x58] sm:$0xff]
        %v2241 = vld [vmem:[#allocation9 + $0x60] sm:$0xff]
        %v2242 = vld [vmem:[#allocation9 + $0x68] sm:$0xff]
        %v2243 = vld [vmem:[#allocation9 + $0x70] sm:$0xff]
        %v2244 = vld [vmem:[#allocation9 + $0x78] sm:$0xff]
        %v2245 = vld [vmem:[#allocation9 + $0x80] sm:$0xff]
        %v2246 = vld [vmem:[#allocation9 + $0x88] sm:$0xff]
        %v2247 = vld [vmem:[#allocation9 + $0x90] sm:$0xff]
        %v2248 = vld [vmem:[#allocation9 + $0x98] sm:$0xff]
        %v2249 = vld [vmem:[#allocation9 + $0xa0] sm:$0xff]
        %v2250 = vld [vmem:[#allocation9 + $0xa8] sm:$0xff]
        %v2251 = vld [vmem:[#allocation9 + $0xb0] sm:$0xff]
        %v2252 = vld [vmem:[#allocation9 + $0xb8] sm:$0xff]
        %v2253 = vld [vmem:[#allocation9 + $0xc0] sm:$0xff]
        %v2254 = vld [vmem:[#allocation9 + $0xc8] sm:$0xff]
        %v2255 = vld [vmem:[#allocation9 + $0xd0] sm:$0xff]
        %v2256 = vld [vmem:[#allocation9 + $0xd8] sm:$0xff]
        %v2257 = vld [vmem:[#allocation9 + $0xe0] sm:$0xff]
        %v2258 = vld [vmem:[#allocation9 + $0xe8] sm:$0xff]
        %v2259 = vld [vmem:[#allocation9 + $0xf0] sm:$0xff]
        %v2260 = vld [vmem:[#allocation9 + $0xf8] sm:$0xff]
        %v2261 = vld [vmem:[%s4] sm:$0x3]
        %v2263 = vlaneseq
        %v2264 = vshrl.u32 %v2263, 7
        %v2265 = vsub.s32 0, %v2264
        %v2266 = vrot.slane %v2261, %v2265
        %v2267 = vlaneseq
        %v2268 = vshrl.u32 %v2267, 7
        %v2269 = vsub.s32 1, %v2268
        %v2270 = vrot.slane %v2261, %v2269
        %v2289 = vunpack.c.l.b16 %v2213
        %v2290 = vunpack.c.h.b16 %v2213
        %v2291 = vunpack.c.l.b16 %v2214
        %v2292 = vunpack.c.h.b16 %v2214
        %v2293 = vunpack.c.l.b16 %v2215
        %v2294 = vunpack.c.h.b16 %v2215
        %v2295 = vunpack.c.l.b16 %v2216
        %v2296 = vunpack.c.h.b16 %v2216
        %v2297 = vunpack.c.l.b16 %v2217
        %v2298 = vunpack.c.h.b16 %v2217
        %v2299 = vunpack.c.l.b16 %v2218
        %v2300 = vunpack.c.h.b16 %v2218
        %v2301 = vunpack.c.l.b16 %v2219
        %v2302 = vunpack.c.h.b16 %v2219
        %v2303 = vunpack.c.l.b16 %v2220
        %v2304 = vunpack.c.h.b16 %v2220
        %v2305 = vunpack.c.l.b16 %v2221
        %v2306 = vunpack.c.h.b16 %v2221
        %v2307 = vunpack.c.l.b16 %v2222
        %v2308 = vunpack.c.h.b16 %v2222
        %v2309 = vunpack.c.l.b16 %v2223
        %v2310 = vunpack.c.h.b16 %v2223
        %v2311 = vunpack.c.l.b16 %v2224
        %v2312 = vunpack.c.h.b16 %v2224
        %v2313 = vunpack.c.l.b16 %v2225
        %v2314 = vunpack.c.h.b16 %v2225
        %v2315 = vunpack.c.l.b16 %v2226
        %v2316 = vunpack.c.h.b16 %v2226
        %v2317 = vunpack.c.l.b16 %v2227
        %v2318 = vunpack.c.h.b16 %v2227
        %v2319 = vunpack.c.l.b16 %v2228
        %v2320 = vunpack.c.h.b16 %v2228
        %v2321 = vpack.c.b16 %v2291, %v2289
        %v2322 = vpack.c.b16 %v2292, %v2290
        %v2323 = vpack.c.b16 %v2295, %v2293
        %v2324 = vpack.c.b16 %v2296, %v2294
        %v2325 = vpack.c.b16 %v2299, %v2297
        %v2326 = vpack.c.b16 %v2300, %v2298
        %v2327 = vpack.c.b16 %v2303, %v2301
        %v2328 = vpack.c.b16 %v2304, %v2302
        %v2329 = vpack.c.b16 %v2307, %v2305
        %v2330 = vpack.c.b16 %v2308, %v2306
        %v2331 = vpack.c.b16 %v2311, %v2309
        %v2332 = vpack.c.b16 %v2312, %v2310
        %v2333 = vpack.c.b16 %v2315, %v2313
        %v2334 = vpack.c.b16 %v2316, %v2314
        %v2335 = vpack.c.b16 %v2319, %v2317
        %v2336 = vpack.c.b16 %v2320, %v2318
        %v2385 = vunpack.c.l.b16 %v2229
        %v2386 = vunpack.c.h.b16 %v2229
        %v2387 = vunpack.c.l.b16 %v2230
        %v2388 = vunpack.c.h.b16 %v2230
        %v2389 = vunpack.c.l.b16 %v2231
        %v2390 = vunpack.c.h.b16 %v2231
        %v2391 = vunpack.c.l.b16 %v2232
        %v2392 = vunpack.c.h.b16 %v2232
        %v2393 = vunpack.c.l.b16 %v2233
        %v2394 = vunpack.c.h.b16 %v2233
        %v2395 = vunpack.c.l.b16 %v2234
        %v2396 = vunpack.c.h.b16 %v2234
        %v2397 = vunpack.c.l.b16 %v2235
        %v2398 = vunpack.c.h.b16 %v2235
        %v2399 = vunpack.c.l.b16 %v2236
        %v2400 = vunpack.c.h.b16 %v2236
        %v2401 = vunpack.c.l.b16 %v2237
        %v2402 = vunpack.c.h.b16 %v2237
        %v2403 = vunpack.c.l.b16 %v2238
        %v2404 = vunpack.c.h.b16 %v2238
        %v2405 = vunpack.c.l.b16 %v2239
        %v2406 = vunpack.c.h.b16 %v2239
        %v2407 = vunpack.c.l.b16 %v2240
        %v2408 = vunpack.c.h.b16 %v2240
        %v2409 = vunpack.c.l.b16 %v2241
        %v2410 = vunpack.c.h.b16 %v2241
        %v2411 = vunpack.c.l.b16 %v2242
        %v2412 = vunpack.c.h.b16 %v2242
        %v2413 = vunpack.c.l.b16 %v2243
        %v2414 = vunpack.c.h.b16 %v2243
        %v2415 = vunpack.c.l.b16 %v2244
        %v2416 = vunpack.c.h.b16 %v2244
        %v2417 = vunpack.c.l.b16 %v2245
        %v2418 = vunpack.c.h.b16 %v2245
        %v2419 = vunpack.c.l.b16 %v2246
        %v2420 = vunpack.c.h.b16 %v2246
        %v2421 = vunpack.c.l.b16 %v2247
        %v2422 = vunpack.c.h.b16 %v2247
        %v2423 = vunpack.c.l.b16 %v2248
        %v2424 = vunpack.c.h.b16 %v2248
        %v2425 = vunpack.c.l.b16 %v2249
        %v2426 = vunpack.c.h.b16 %v2249
        %v2427 = vunpack.c.l.b16 %v2250
        %v2428 = vunpack.c.h.b16 %v2250
        %v2429 = vunpack.c.l.b16 %v2251
        %v2430 = vunpack.c.h.b16 %v2251
        %v2431 = vunpack.c.l.b16 %v2252
        %v2432 = vunpack.c.h.b16 %v2252
        %v2433 = vunpack.c.l.b16 %v2253
        %v2434 = vunpack.c.h.b16 %v2253
        %v2435 = vunpack.c.l.b16 %v2254
        %v2436 = vunpack.c.h.b16 %v2254
        %v2437 = vunpack.c.l.b16 %v2255
        %v2438 = vunpack.c.h.b16 %v2255
        %v2439 = vunpack.c.l.b16 %v2256
        %v2440 = vunpack.c.h.b16 %v2256
        %v2441 = vunpack.c.l.b16 %v2257
        %v2442 = vunpack.c.h.b16 %v2257
        %v2443 = vunpack.c.l.b16 %v2258
        %v2444 = vunpack.c.h.b16 %v2258
        %v2445 = vunpack.c.l.b16 %v2259
        %v2446 = vunpack.c.h.b16 %v2259
        %v2447 = vunpack.c.l.b16 %v2260
        %v2448 = vunpack.c.h.b16 %v2260
        %v2449 = vpack.c.b16 %v2387, %v2385
        %v2450 = vpack.c.b16 %v2388, %v2386
        %v2451 = vpack.c.b16 %v2391, %v2389
        %v2452 = vpack.c.b16 %v2392, %v2390
        %v2453 = vpack.c.b16 %v2395, %v2393
        %v2454 = vpack.c.b16 %v2396, %v2394
        %v2455 = vpack.c.b16 %v2399, %v2397
        %v2456 = vpack.c.b16 %v2400, %v2398
        %v2457 = vpack.c.b16 %v2403, %v2401
        %v2458 = vpack.c.b16 %v2404, %v2402
        %v2459 = vpack.c.b16 %v2407, %v2405
        %v2460 = vpack.c.b16 %v2408, %v2406
        %v2461 = vpack.c.b16 %v2411, %v2409
        %v2462 = vpack.c.b16 %v2412, %v2410
        %v2463 = vpack.c.b16 %v2415, %v2413
        %v2464 = vpack.c.b16 %v2416, %v2414
        %v2465 = vpack.c.b16 %v2419, %v2417
        %v2466 = vpack.c.b16 %v2420, %v2418
        %v2467 = vpack.c.b16 %v2423, %v2421
        %v2468 = vpack.c.b16 %v2424, %v2422
        %v2469 = vpack.c.b16 %v2427, %v2425
        %v2470 = vpack.c.b16 %v2428, %v2426
        %v2471 = vpack.c.b16 %v2431, %v2429
        %v2472 = vpack.c.b16 %v2432, %v2430
        %v2473 = vpack.c.b16 %v2435, %v2433
        %v2474 = vpack.c.b16 %v2436, %v2434
        %v2475 = vpack.c.b16 %v2439, %v2437
        %v2476 = vpack.c.b16 %v2440, %v2438
        %v2477 = vpack.c.b16 %v2443, %v2441
        %v2478 = vpack.c.b16 %v2444, %v2442
        %v2479 = vpack.c.b16 %v2447, %v2445
        %v2480 = vpack.c.b16 %v2448, %v2446
        %2513 = vmatprep.subr.bf16.mxu0 %v2464
        %2514 = vmatpush1.bf16.msra.mxu0 %v2463
        %2515 = vmatprep.subr.bf16.mxu0 %v2462
        %2516 = vmatpush1.bf16.msra.mxu0 %v2461
        %2517 = vmatprep.subr.bf16.mxu0 %v2460
        %2518 = vmatpush1.bf16.msra.mxu0 %v2459
        %2519 = vmatprep.subr.bf16.mxu0 %v2458
        %2520 = vmatpush1.bf16.msra.mxu0 %v2457
        %2521 = vmatprep.subr.bf16.mxu0 %v2456
        %2522 = vmatpush1.bf16.msra.mxu0 %v2455
        %2523 = vmatprep.subr.bf16.mxu0 %v2454
        %2524 = vmatpush1.bf16.msra.mxu0 %v2453
        %2525 = vmatprep.subr.bf16.mxu0 %v2452
        %2526 = vmatpush1.bf16.msra.mxu0 %v2451
        %2527 = vmatprep.subr.bf16.mxu0 %v2450
        %2528 = vmatpush1.bf16.msra.mxu0 %v2449
        %2529 = vmatprep.subr.bf16.mxu0 %v2480
        %2530 = vmatpush2.bf16.msra.mxu0 %v2479
        %2531 = vmatprep.subr.bf16.mxu0 %v2478
        %2532 = vmatpush2.bf16.msra.mxu0 %v2477
        %2533 = vmatprep.subr.bf16.mxu0 %v2476
        %2534 = vmatpush2.bf16.msra.mxu0 %v2475
        %2535 = vmatprep.subr.bf16.mxu0 %v2474
        %2536 = vmatpush2.bf16.msra.mxu0 %v2473
        %2537 = vmatprep.subr.bf16.mxu0 %v2472
        %2538 = vmatpush2.bf16.msra.mxu0 %v2471
        %2539 = vmatprep.subr.bf16.mxu0 %v2470
        %2540 = vmatpush2.bf16.msra.mxu0 %v2469
        %2541 = vmatprep.subr.bf16.mxu0 %v2468
        %2542 = vmatpush2.bf16.msra.mxu0 %v2467
        %2543 = vmatprep.subr.bf16.mxu0 %v2466
        %2544 = vmatpush2.bf16.msra.mxu0 %v2465
        %2545 = vmatprep.mubr.bf16.mxu0 %v2322
        %2546 = vmatmul.mubr.bf16.gmra.mxu0 %v2321
        %v2547 = vpop.f32.mrf.mxu0
        %v2548 = vadd.f32 %v2266, %v2547
        %v2549 = vpop.f32.mrf.mxu0
        %v2550 = vadd.f32 %v2270, %v2549
        %v2551 = vpop.f32.mrf.mxu0
        %v2552 = vadd.f32 %v2266, %v2551
        %v2553 = vpop.f32.mrf.mxu0
        %v2554 = vadd.f32 %v2270, %v2553
        %2555 = vmatprep.mubr.bf16.mxu0 %v2324
        %2556 = vmatmul.mubr.bf16.gmra.mxu0 %v2323
        %v2557 = vpop.f32.mrf.mxu0
        %v2558 = vadd.f32 %v2266, %v2557
        %v2559 = vpop.f32.mrf.mxu0
        %v2560 = vadd.f32 %v2270, %v2559
        %v2561 = vpop.f32.mrf.mxu0
        %v2562 = vadd.f32 %v2266, %v2561
        %v2563 = vpop.f32.mrf.mxu0
        %v2564 = vadd.f32 %v2270, %v2563
        %2565 = vmatprep.mubr.bf16.mxu0 %v2326
        %2566 = vmatmul.mubr.bf16.gmra.mxu0 %v2325
        %v2567 = vpop.f32.mrf.mxu0
        %v2568 = vadd.f32 %v2266, %v2567
        %v2569 = vpop.f32.mrf.mxu0
        %v2570 = vadd.f32 %v2270, %v2569
        %v2571 = vpop.f32.mrf.mxu0
        %v2572 = vadd.f32 %v2266, %v2571
        %v2573 = vpop.f32.mrf.mxu0
        %v2574 = vadd.f32 %v2270, %v2573
        %2575 = vmatprep.mubr.bf16.mxu0 %v2328
        %2576 = vmatmul.mubr.bf16.gmra.mxu0 %v2327
        %v2577 = vpop.f32.mrf.mxu0
        %v2578 = vadd.f32 %v2266, %v2577
        %v2579 = vpop.f32.mrf.mxu0
        %v2580 = vadd.f32 %v2270, %v2579
        %v2581 = vpop.f32.mrf.mxu0
        %v2582 = vadd.f32 %v2266, %v2581
        %v2583 = vpop.f32.mrf.mxu0
        %v2584 = vadd.f32 %v2270, %v2583
        %2585 = vmatprep.mubr.bf16.mxu0 %v2330
        %2586 = vmatmul.mubr.bf16.gmra.mxu0 %v2329
        %v2587 = vpop.f32.mrf.mxu0
        %v2588 = vadd.f32 %v2266, %v2587
        %v2589 = vpop.f32.mrf.mxu0
        %v2590 = vadd.f32 %v2270, %v2589
        %v2591 = vpop.f32.mrf.mxu0
        %v2592 = vadd.f32 %v2266, %v2591
        %v2593 = vpop.f32.mrf.mxu0
        %v2594 = vadd.f32 %v2270, %v2593
        %2595 = vmatprep.mubr.bf16.mxu0 %v2332
        %2596 = vmatmul.mubr.bf16.gmra.mxu0 %v2331
        %v2597 = vpop.f32.mrf.mxu0
        %v2598 = vadd.f32 %v2266, %v2597
        %v2599 = vpop.f32.mrf.mxu0
        %v2600 = vadd.f32 %v2270, %v2599
        %v2601 = vpop.f32.mrf.mxu0
        %v2602 = vadd.f32 %v2266, %v2601
        %v2603 = vpop.f32.mrf.mxu0
        %v2604 = vadd.f32 %v2270, %v2603
        %2605 = vmatprep.mubr.bf16.mxu0 %v2334
        %2606 = vmatmul.mubr.bf16.gmra.mxu0 %v2333
        %v2607 = vpop.f32.mrf.mxu0
        %v2608 = vadd.f32 %v2266, %v2607
        %v2609 = vpop.f32.mrf.mxu0
        %v2610 = vadd.f32 %v2270, %v2609
        %v2611 = vpop.f32.mrf.mxu0
        %v2612 = vadd.f32 %v2266, %v2611
        %v2613 = vpop.f32.mrf.mxu0
        %v2614 = vadd.f32 %v2270, %v2613
        %2615 = vmatprep.mubr.bf16.mxu0 %v2336
        %2616 = vmatmul.mubr.bf16.gmra.mxu0 %v2335
        %v2617 = vpop.f32.mrf.mxu0
        %v2618 = vadd.f32 %v2266, %v2617
        %v2619 = vpop.f32.mrf.mxu0
        %v2620 = vadd.f32 %v2270, %v2619
        %v2621 = vpop.f32.mrf.mxu0
        %v2622 = vadd.f32 %v2266, %v2621
        %v2623 = vpop.f32.mrf.mxu0
        %v2624 = vadd.f32 %v2270, %v2623
        %2625 = vdwg.mxu0
        %2626 = vst [vmem:[%s284] sm:$0xff] %v2548
        %2627 = vst [vmem:[%s284 + $0x8] sm:$0xff] %v2550
        %2628 = vst [vmem:[%s284 + $0x10] sm:$0xff] %v2552
        %2629 = vst [vmem:[%s284 + $0x18] sm:$0xff] %v2554
        %2630 = vst [vmem:[%s284 + $0x20] sm:$0xff] %v2558
        %2631 = vst [vmem:[%s284 + $0x28] sm:$0xff] %v2560
        %2632 = vst [vmem:[%s284 + $0x30] sm:$0xff] %v2562
        %2633 = vst [vmem:[%s284 + $0x38] sm:$0xff] %v2564
        %2634 = vst [vmem:[%s284 + $0x40] sm:$0xff] %v2568
        %2635 = vst [vmem:[%s284 + $0x48] sm:$0xff] %v2570
        %2636 = vst [vmem:[%s284 + $0x50] sm:$0xff] %v2572
        %2637 = vst [vmem:[%s284 + $0x58] sm:$0xff] %v2574
        %2638 = vst [vmem:[%s284 + $0x60] sm:$0xff] %v2578
        %2639 = vst [vmem:[%s284 + $0x68] sm:$0xff] %v2580
        %2640 = vst [vmem:[%s284 + $0x70] sm:$0xff] %v2582
        %2641 = vst [vmem:[%s284 + $0x78] sm:$0xff] %v2584
        %2642 = vst [vmem:[%s284 + $0x80] sm:$0xff] %v2588
        %2643 = vst [vmem:[%s284 + $0x88] sm:$0xff] %v2590
        %2644 = vst [vmem:[%s284 + $0x90] sm:$0xff] %v2592
        %2645 = vst [vmem:[%s284 + $0x98] sm:$0xff] %v2594
        %2646 = vst [vmem:[%s284 + $0xa0] sm:$0xff] %v2598
        %2647 = vst [vmem:[%s284 + $0xa8] sm:$0xff] %v2600
        %2648 = vst [vmem:[%s284 + $0xb0] sm:$0xff] %v2602
        %2649 = vst [vmem:[%s284 + $0xb8] sm:$0xff] %v2604
        %2650 = vst [vmem:[%s284 + $0xc0] sm:$0xff] %v2608
        %2651 = vst [vmem:[%s284 + $0xc8] sm:$0xff] %v2610
        %2652 = vst [vmem:[%s284 + $0xd0] sm:$0xff] %v2612
        %2653 = vst [vmem:[%s284 + $0xd8] sm:$0xff] %v2614
        %2654 = vst [vmem:[%s284 + $0xe0] sm:$0xff] %v2618
        %2655 = vst [vmem:[%s284 + $0xe8] sm:$0xff] %v2620
        %2656 = vst [vmem:[%s284 + $0xf0] sm:$0xff] %v2622
        %2657 = vst [vmem:[%s284 + $0xf8] sm:$0xff] %v2624
        %s2658 = sand.u32 %s142, 1
        %s2659 = scalar_lea.sflag [#allocation5], %s2658
        %s2660 = sand.u32 %s142, 1
        %s2661 = smul.addr %s2660, 256
        %s2662 = scalar_lea.vmem [#allocation11], %s2661
        // Predicated region
        $region57: #{tpu_custom_call.1} parent=39 // pred_check
          %p2663 = pneg %p152
        $region58: #{tpu_custom_call.1} parent=39 // pred_check_branch
          %2665 = sbr.rel (%p2663) target = $region60
        $region59: #{tpu_custom_call.1} parent=39 // pred_region
          %s2667 = ssub.s32 4096, 4096
          %2668 = vsyncadd %s2659, %s2667
          %s2669 = smul.addr %s24, 32
          %s2670 = smul.addr %s2669, 128
          %s2671 = scalar_lea.hbm %s5, %s2670
          %s2672 = sshll.u32 %s2662, 4
          %s2673 = int_to_ptr.vmem [resolvable:$true] %s2672
          %2678 = dma.vmem_to_hbm [thread:$0]  %s2673, 4096, %s2671, %s2659, 256, 256, 16
        $region60: #{tpu_custom_call.1} parent=39 // pred_fallthru
          _
      $region40: #{tpu_custom_call.1} parent=5 // pred_fallthru
        _
      %p2679 = scmp.le.s32.totalorder 2, %s19
      // Predicated region
      $region61: #{tpu_custom_call.1} parent=5 // pred_check
        %p2680 = pneg %p2679
      $region62: #{tpu_custom_call.1} parent=5 // pred_check_branch
        %2682 = sbr.rel (%p2680) target = $region64
      $region63: #{tpu_custom_call.1} parent=5 // pred_region
        %s2683 = ssub.s32 %s19, 2
        // Predicated region
        $region65: #{tpu_custom_call.1} parent=63 // pred_check
          %p2684 = pneg %p158
        $region66: #{tpu_custom_call.1} parent=63 // pred_check_branch
          %2686 = sbr.rel (%p2684) target = $region68
        $region67: #{tpu_custom_call.1} parent=63 // pred_region
          %s2687 = sand.u32 %s143, 1
          %s2688 = scalar_lea.sflag [#allocation5], %s2687
          %s2689 = sand.u32 %s143, 1
          %s2690 = smul.addr %s2689, 256
          %s2691 = scalar_lea.vmem [#allocation11], %s2690
          %2692 = dma.done %s2688, 4096
        $region68: #{tpu_custom_call.1} parent=63 // pred_fallthru
          _
      $region64: #{tpu_custom_call.1} parent=5 // pred_fallthru
        _
    $region6: #{tpu_custom_call.1} parent=1 // loop_footer
      %s23 = sadd.s32 1, %s19
    $region7: #{tpu_custom_call.1} parent=1 // loop_footer_branch
      %18 = sbr.rel target = $region3
    $region8: #{tpu_custom_call.1} parent=1 // loop_exit
      _
    %2693 = vsyncpa [#allocation4], 1
    %s2694 = scalar_lea.sflag [#allocation4], 1
    %2695 = vsyncpa %s2694, 1
    %2696 = vsyncpa [#allocation7], 1
    %2697 = vsyncpa [#allocation10], 1
    %2698 = vsyncpa [#allocation5], 1
    %s2699 = scalar_lea.sflag [#allocation5], 1
    %2700 = vsyncpa %s2699, 1

</llo_original>
